<compile_context>
chip_gen: v7x
topology: tpu7x:2x2x1
jax: 0.10.0
libtpu: 0.0.40
codegen_flags: <defaults>
</compile_context>

<pallas_src>
import functools

import jax
import jax.numpy as jnp
from jax import lax
from jax.experimental import pallas as pl
from jax.experimental.pallas import tpu as pltpu


def _lstm_kernel(gx_ref, whh_ref, mask_ref,      # inputs
                 m_ref, h_ref,                   # outputs
                 *, seq_len, hidden_size):
    """Single-invocation LSTM recurrence.

    gx_ref   : (B, T*4H)  precomputed x_t @ W_ih^T + b, lane-dense per step
    whh_ref  : (H, 4H)    recurrent weight (pre-transposed)
    mask_ref : (B, T)     f32 {0,1} validity mask (pack_padded_sequence)
    m_ref    : (B, T*H)   per-step outputs, lane-dense slab
    h_ref    : (B, H)     final hidden state (last valid step per batch row)
    """
    T, H = seq_len, hidden_size
    G = 4 * H
    B = gx_ref.shape[0]

    whh = whh_ref[...]                                   # (H, 4H), hoisted
    lane = lax.broadcasted_iota(jnp.int32, (B, G), 1)    # hoisted lane mask
    tanh_lanes = (lane >= 2 * H) & (lane < 3 * H)        # g-gate lanes [i|f|g|o]

    h = jnp.zeros((B, H), jnp.float32)                   # carried in vregs
    c = jnp.zeros((B, H), jnp.float32)

    # Fully unrolled time loop: all slices below are static -> unmasked,
    # aligned vector loads/stores; LLO can overlap consecutive steps.
    for t in range(T):
        gates = gx_ref[:, t * G:(t + 1) * G] + jnp.dot(
            h, whh, preferred_element_type=jnp.float32)   # (B, 4H)

        # Full-width EUP passes + one select instead of 4 sub-vreg slices.
        act = jnp.where(tanh_lanes, jnp.tanh(gates), jax.nn.sigmoid(gates))
        i_g = act[:, 0 * H:1 * H]
        f_g = act[:, 1 * H:2 * H]
        g_g = act[:, 2 * H:3 * H]
        o_g = act[:, 3 * H:4 * H]

        c_new = f_g * c + i_g * g_g
        h_new = o_g * jnp.tanh(c_new)

        m = mask_ref[:, t:t + 1]                          # (B, 1) f32 {0,1}
        c = m * c_new + (1.0 - m) * c                     # freeze state on pad
        h = m * h_new + (1.0 - m) * h
        m_ref[:, t * H:(t + 1) * H] = m * h_new           # zero rows on pad

    h_ref[...] = h


def lstm_encoder_pallas(x_btd, input_len, w_ih, w_hh, b_ih, b_hh):
    """x_btd: (B, T, D) batch-first (PyTorch batch_first RNNEncoder input).
    Returns (hidden, M) with hidden: (B, H), M: (B, T, H)."""
    B, T, D = x_btd.shape
    H = w_hh.shape[1]
    G = 4 * H

    x = x_btd.astype(jnp.float32)
    wih_t = jnp.asarray(w_ih.T, jnp.float32)              # (D, 4H)
    whh_t = jnp.asarray(w_hh.T, jnp.float32)              # (H, 4H)
    bias = (b_ih + b_hh).astype(jnp.float32)              # (4H,)

    # Hoisted input projection: one big parallel GEMM (out of the recurrence).
    gx = jnp.einsum('btd,dg->btg', x, wih_t,
                    precision=jax.lax.Precision.HIGHEST) + bias[None, None, :]
    gx = gx.reshape(B, T * G)                              # lane-dense, free reshape

    # pack_padded_sequence validity mask as f32 {0,1}.
    mask = (jnp.arange(T, dtype=jnp.int32)[None, :]
            < input_len.astype(jnp.int32)[:, None]).astype(jnp.float32)  # (B, T)

    kernel = functools.partial(_lstm_kernel, seq_len=T, hidden_size=H)

    M_flat, hidden = pl.pallas_call(
        kernel,
        out_shape=(jax.ShapeDtypeStruct((B, T * H), jnp.float32),
                   jax.ShapeDtypeStruct((B, H), jnp.float32)),
        grid_spec=pltpu.PrefetchScalarGridSpec(
            num_scalar_prefetch=0,
            grid=(1,),                                     # single invocation
            in_specs=[
                pl.BlockSpec((B, T * G), lambda i: (0, 0)),   # gates_x slab
                pl.BlockSpec((H, G), lambda i: (0, 0)),       # W_hh^T
                pl.BlockSpec((B, T), lambda i: (0, 0)),       # validity mask
            ],
            out_specs=[
                pl.BlockSpec((B, T * H), lambda i: (0, 0)),   # M slab (lane-dense)
                pl.BlockSpec((B, H), lambda i: (0, 0)),       # final hidden
            ],
        ),
        compiler_params=pltpu.CompilerParams(
            dimension_semantics=("arbitrary",)),           # recurrence is sequential
    )(gx, whh_t, mask)

    M = M_flat.reshape(B, T, H)                            # free reshape, batch-first
    return hidden, M


def lstm_encoder_ref(x_btd, input_len, w_ih, w_hh, b_ih, b_hh):
    """Pure-JAX reference (lax.scan) with the same masking semantics."""
    B, T, D = x_btd.shape
    H = w_hh.shape[1]
    x_tbd = jnp.transpose(x_btd, (1, 0, 2)).astype(jnp.float32)
    bias = (b_ih + b_hh).astype(jnp.float32)
    hp = jax.lax.Precision.HIGHEST

    def step(carry, xt_t):
        h, c = carry
        x_t, t = xt_t
        gates = (jnp.dot(x_t, w_ih.T, precision=hp)
                 + jnp.dot(h, w_hh.T, precision=hp) + bias)
        i = jax.nn.sigmoid(gates[:, 0 * H:1 * H])
        f = jax.nn.sigmoid(gates[:, 1 * H:2 * H])
        g = jnp.tanh(gates[:, 2 * H:3 * H])
        o = jax.nn.sigmoid(gates[:, 3 * H:4 * H])
        c_new = f * c + i * g
        h_new = o * jnp.tanh(c_new)
        valid = (t < input_len)[:, None]
        h2 = jnp.where(valid, h_new, h)
        c2 = jnp.where(valid, c_new, c)
        out = jnp.where(valid, h_new, 0.0)
        return (h2, c2), out

    init = (jnp.zeros((B, H), jnp.float32), jnp.zeros((B, H), jnp.float32))
    (hT, _), outs = lax.scan(step, init, (x_tbd, jnp.arange(T)))
    return hT, jnp.transpose(outs, (1, 0, 2))


if __name__ == "__main__":
    # Small shapes implied by Encoder.forward: input (B, T, input_size), input_len (B,)
    B, T, D, H = 2, 8, 16, 32

    key = jax.random.PRNGKey(0)
    kx, k1, k2, k3, k4 = jax.random.split(key, 5)

    x = jax.random.normal(kx, (B, T, D), dtype=jnp.float32)
    input_len = jnp.array([T, 5], dtype=jnp.int32)   # second sequence is padded

    # PyTorch nn.LSTM init: U(-1/sqrt(H), 1/sqrt(H)), gate order [i, f, g, o].
    bound = 1.0 / jnp.sqrt(jnp.float32(H))
    w_ih = jax.random.uniform(k1, (4 * H, D), jnp.float32, -bound, bound)
    w_hh = jax.random.uniform(k2, (4 * H, H), jnp.float32, -bound, bound)
    b_ih = jax.random.uniform(k3, (4 * H,), jnp.float32, -bound, bound)
    b_hh = jax.random.uniform(k4, (4 * H,), jnp.float32, -bound, bound)

    hidden, M = lstm_encoder_pallas(x, input_len, w_ih, w_hh, b_ih, b_hh)
    jax.block_until_ready((hidden, M))

    hidden_ref, M_ref = lstm_encoder_ref(x, input_len, w_ih, w_hh, b_ih, b_hh)
    # Tightened vs. the previous 1e-2 tolerance (f32-vs-f32 comparison).
    assert jnp.allclose(hidden, hidden_ref, atol=1e-5, rtol=1e-4)
    assert jnp.allclose(M, M_ref, atol=1e-5, rtol=1e-4)
    assert hidden.shape == (B, H) and M.shape == (B, T, H)

    print("KERNEL_OK")
</pallas_src>

<mosaic_0001>
module attributes {stable_mosaic.version = 11 : i64} {
  func.func @_lstm_kernel(%arg0: i32, %arg1: memref<2x1024xf32, #tpu.memory_space<vmem>>, %arg2: memref<32x128xf32, #tpu.memory_space<vmem>>, %arg3: memref<2x8xf32, #tpu.memory_space<vmem>>, %arg4: memref<2x256xf32, #tpu.memory_space<vmem>>, %arg5: memref<2x32xf32, #tpu.memory_space<vmem>>) attributes {dimension_semantics = [#tpu.dimension_semantics<arbitrary>], iteration_bounds = array<i64: 1>, scalar_prefetch = 0 : i64, scratch_operands = 0 : i64, tpu.core_type = #tpu.core_type<tc>, window_params = [{pipeline_mode = #tpu.pipeline_mode<synchronous>, transform_indices = @transform_0, window_bounds = array<i64: 2, 1024>}, {pipeline_mode = #tpu.pipeline_mode<synchronous>, transform_indices = @transform_1, window_bounds = array<i64: 32, 128>}, {pipeline_mode = #tpu.pipeline_mode<synchronous>, transform_indices = @transform_2, window_bounds = array<i64: 2, 8>}, {pipeline_mode = #tpu.pipeline_mode<synchronous>, transform_indices = @transform_3, window_bounds = array<i64: 2, 256>}, {pipeline_mode = #tpu.pipeline_mode<synchronous>, transform_indices = @transform_4, window_bounds = array<i64: 2, 32>}]} {
    %c0 = arith.constant 0 : index
    %c0_0 = arith.constant 0 : index
    %0 = vector.load %arg2[%c0, %c0_0] : memref<32x128xf32, #tpu.memory_space<vmem>>, vector<32x128xf32>
    %1 = tpu.iota {dimensions = array<i32: 1>} : vector<2x128xi32>
    %c64_i32 = arith.constant 64 : i32
    %2 = vector.broadcast %c64_i32 : i32 to vector<2x128xi32>
    %3 = arith.cmpi sge, %1, %2 : vector<2x128xi32>
    %c96_i32 = arith.constant 96 : i32
    %4 = vector.broadcast %c96_i32 : i32 to vector<2x128xi32>
    %5 = arith.cmpi slt, %1, %4 : vector<2x128xi32>
    %6 = arith.andi %3, %5 : vector<2x128xi1>
    %cst = arith.constant 0.000000e+00 : f32
    %7 = vector.broadcast %cst : f32 to vector<2x32xf32>
    %cst_1 = arith.constant 0.000000e+00 : f32
    %8 = vector.broadcast %cst_1 : f32 to vector<2x32xf32>
    %c0_2 = arith.constant 0 : index
    %c0_3 = arith.constant 0 : index
    %9 = vector.load %arg1[%c0_2, %c0_3] : memref<2x1024xf32, #tpu.memory_space<vmem>>, vector<2x128xf32>
    %cst_4 = arith.constant dense<0.000000e+00> : vector<2x128xf32>
    %10 = tpu.matmul %7, %0, %cst_4 {dimension_numbers = #tpu.dot_dimension_numbers<[1], [0], [0], [1], [0, 0, 1, 1], [], []>} : vector<2x32xf32>, vector<32x128xf32>, vector<2x128xf32> -> vector<2x128xf32>
    %11 = arith.addf %9, %10 : vector<2x128xf32>
    %12 = math.tanh %11 : vector<2x128xf32>
    %13 = arith.negf %11 : vector<2x128xf32>
    %14 = math.exp %13 : vector<2x128xf32>
    %cst_5 = arith.constant 1.000000e+00 : f32
    %15 = vector.broadcast %cst_5 : f32 to vector<2x128xf32>
    %16 = arith.addf %15, %14 : vector<2x128xf32>
    %17 = arith.divf %15, %16 : vector<2x128xf32>
    %18 = arith.select %6, %12, %17 : vector<2x128xi1>, vector<2x128xf32>
    %19 = vector.extract_strided_slice %18 {offsets = [0, 0], sizes = [2, 32], strides = [1, 1]} : vector<2x128xf32> to vector<2x32xf32>
    %20 = vector.extract_strided_slice %18 {offsets = [0, 32], sizes = [2, 32], strides = [1, 1]} : vector<2x128xf32> to vector<2x32xf32>
    %21 = vector.extract_strided_slice %18 {offsets = [0, 64], sizes = [2, 32], strides = [1, 1]} : vector<2x128xf32> to vector<2x32xf32>
    %22 = vector.extract_strided_slice %18 {offsets = [0, 96], sizes = [2, 32], strides = [1, 1]} : vector<2x128xf32> to vector<2x32xf32>
    %23 = arith.mulf %20, %8 : vector<2x32xf32>
    %24 = arith.mulf %19, %21 : vector<2x32xf32>
    %25 = arith.addf %23, %24 : vector<2x32xf32>
    %26 = math.tanh %25 : vector<2x32xf32>
    %27 = arith.mulf %22, %26 : vector<2x32xf32>
    %c0_6 = arith.constant 0 : index
    %c0_7 = arith.constant 0 : index
    %28 = vector.load %arg3[%c0_6, %c0_7] : memref<2x8xf32, #tpu.memory_space<vmem>>, vector<2x1xf32>
    %29 = vector.broadcast %28 : vector<2x1xf32> to vector<2x32xf32>
    %30 = arith.mulf %29, %25 : vector<2x32xf32>
    %cst_8 = arith.constant 1.000000e+00 : f32
    %31 = vector.broadcast %cst_8 : f32 to vector<2x1xf32>
    %32 = arith.subf %31, %28 : vector<2x1xf32>
    %33 = vector.broadcast %32 : vector<2x1xf32> to vector<2x32xf32>
    %34 = arith.mulf %33, %8 : vector<2x32xf32>
    %35 = arith.addf %30, %34 : vector<2x32xf32>
    %36 = vector.broadcast %28 : vector<2x1xf32> to vector<2x32xf32>
    %37 = arith.mulf %36, %27 : vector<2x32xf32>
    %cst_9 = arith.constant 1.000000e+00 : f32
    %38 = vector.broadcast %cst_9 : f32 to vector<2x1xf32>
    %39 = arith.subf %38, %28 : vector<2x1xf32>
    %40 = vector.broadcast %39 : vector<2x1xf32> to vector<2x32xf32>
    %41 = arith.mulf %40, %7 : vector<2x32xf32>
    %42 = arith.addf %37, %41 : vector<2x32xf32>
    %43 = vector.broadcast %28 : vector<2x1xf32> to vector<2x32xf32>
    %44 = arith.mulf %43, %27 : vector<2x32xf32>
    %c0_10 = arith.constant 0 : index
    %c0_11 = arith.constant 0 : index
    %45 = vector.load %arg4[%c0_10, %c0_11] : memref<2x256xf32, #tpu.memory_space<vmem>>, vector<2x32xf32>
    tpu.vector_store %arg4[%c0_10, %c0_11], %44 {strides = array<i32>} : memref<2x256xf32, #tpu.memory_space<vmem>>, vector<2x32xf32>,
    %c0_12 = arith.constant 0 : index
    %c128 = arith.constant 128 : index
    %46 = vector.load %arg1[%c0_12, %c128] : memref<2x1024xf32, #tpu.memory_space<vmem>>, vector<2x128xf32>
    %cst_13 = arith.constant dense<0.000000e+00> : vector<2x128xf32>
    %47 = tpu.matmul %42, %0, %cst_13 {dimension_numbers = #tpu.dot_dimension_numbers<[1], [0], [0], [1], [0, 0, 1, 1], [], []>} : vector<2x32xf32>, vector<32x128xf32>, vector<2x128xf32> -> vector<2x128xf32>
    %48 = arith.addf %46, %47 : vector<2x128xf32>
    %49 = math.tanh %48 : vector<2x128xf32>
    %50 = arith.negf %48 : vector<2x128xf32>
    %51 = math.exp %50 : vector<2x128xf32>
    %cst_14 = arith.constant 1.000000e+00 : f32
    %52 = vector.broadcast %cst_14 : f32 to vector<2x128xf32>
    %53 = arith.addf %52, %51 : vector<2x128xf32>
    %54 = arith.divf %52, %53 : vector<2x128xf32>
    %55 = arith.select %6, %49, %54 : vector<2x128xi1>, vector<2x128xf32>
    %56 = vector.extract_strided_slice %55 {offsets = [0, 0], sizes = [2, 32], strides = [1, 1]} : vector<2x128xf32> to vector<2x32xf32>
    %57 = vector.extract_strided_slice %55 {offsets = [0, 32], sizes = [2, 32], strides = [1, 1]} : vector<2x128xf32> to vector<2x32xf32>
    %58 = vector.extract_strided_slice %55 {offsets = [0, 64], sizes = [2, 32], strides = [1, 1]} : vector<2x128xf32> to vector<2x32xf32>
    %59 = vector.extract_strided_slice %55 {offsets = [0, 96], sizes = [2, 32], strides = [1, 1]} : vector<2x128xf32> to vector<2x32xf32>
    %60 = arith.mulf %57, %35 : vector<2x32xf32>
    %61 = arith.mulf %56, %58 : vector<2x32xf32>
    %62 = arith.addf %60, %61 : vector<2x32xf32>
    %63 = math.tanh %62 : vector<2x32xf32>
    %64 = arith.mulf %59, %63 : vector<2x32xf32>
    %c0_15 = arith.constant 0 : index
    %c1 = arith.constant 1 : index
    %65 = vector.load %arg3[%c0_15, %c1] : memref<2x8xf32, #tpu.memory_space<vmem>>, vector<2x1xf32>
    %66 = vector.broadcast %65 : vector<2x1xf32> to vector<2x32xf32>
    %67 = arith.mulf %66, %62 : vector<2x32xf32>
    %cst_16 = arith.constant 1.000000e+00 : f32
    %68 = vector.broadcast %cst_16 : f32 to vector<2x1xf32>
    %69 = arith.subf %68, %65 : vector<2x1xf32>
    %70 = vector.broadcast %69 : vector<2x1xf32> to vector<2x32xf32>
    %71 = arith.mulf %70, %35 : vector<2x32xf32>
    %72 = arith.addf %67, %71 : vector<2x32xf32>
    %73 = vector.broadcast %65 : vector<2x1xf32> to vector<2x32xf32>
    %74 = arith.mulf %73, %64 : vector<2x32xf32>
    %cst_17 = arith.constant 1.000000e+00 : f32
    %75 = vector.broadcast %cst_17 : f32 to vector<2x1xf32>
    %76 = arith.subf %75, %65 : vector<2x1xf32>
    %77 = vector.broadcast %76 : vector<2x1xf32> to vector<2x32xf32>
    %78 = arith.mulf %77, %42 : vector<2x32xf32>
    %79 = arith.addf %74, %78 : vector<2x32xf32>
    %80 = vector.broadcast %65 : vector<2x1xf32> to vector<2x32xf32>
    %81 = arith.mulf %80, %64 : vector<2x32xf32>
    %c0_18 = arith.constant 0 : index
    %c32 = arith.constant 32 : index
    %82 = vector.load %arg4[%c0_18, %c32] : memref<2x256xf32, #tpu.memory_space<vmem>>, vector<2x32xf32>
    tpu.vector_store %arg4[%c0_18, %c32], %81 {strides = array<i32>} : memref<2x256xf32, #tpu.memory_space<vmem>>, vector<2x32xf32>,
    %c0_19 = arith.constant 0 : index
    %c256 = arith.constant 256 : index
    %83 = vector.load %arg1[%c0_19, %c256] : memref<2x1024xf32, #tpu.memory_space<vmem>>, vector<2x128xf32>
    %cst_20 = arith.constant dense<0.000000e+00> : vector<2x128xf32>
    %84 = tpu.matmul %79, %0, %cst_20 {dimension_numbers = #tpu.dot_dimension_numbers<[1], [0], [0], [1], [0, 0, 1, 1], [], []>} : vector<2x32xf32>, vector<32x128xf32>, vector<2x128xf32> -> vector<2x128xf32>
    %85 = arith.addf %83, %84 : vector<2x128xf32>
    %86 = math.tanh %85 : vector<2x128xf32>
    %87 = arith.negf %85 : vector<2x128xf32>
    %88 = math.exp %87 : vector<2x128xf32>
    %cst_21 = arith.constant 1.000000e+00 : f32
    %89 = vector.broadcast %cst_21 : f32 to vector<2x128xf32>
    %90 = arith.addf %89, %88 : vector<2x128xf32>
    %91 = arith.divf %89, %90 : vector<2x128xf32>
    %92 = arith.select %6, %86, %91 : vector<2x128xi1>, vector<2x128xf32>
    %93 = vector.extract_strided_slice %92 {offsets = [0, 0], sizes = [2, 32], strides = [1, 1]} : vector<2x128xf32> to vector<2x32xf32>
    %94 = vector.extract_strided_slice %92 {offsets = [0, 32], sizes = [2, 32], strides = [1, 1]} : vector<2x128xf32> to vector<2x32xf32>
    %95 = vector.extract_strided_slice %92 {offsets = [0, 64], sizes = [2, 32], strides = [1, 1]} : vector<2x128xf32> to vector<2x32xf32>
    %96 = vector.extract_strided_slice %92 {offsets = [0, 96], sizes = [2, 32], strides = [1, 1]} : vector<2x128xf32> to vector<2x32xf32>
    %97 = arith.mulf %94, %72 : vector<2x32xf32>
    %98 = arith.mulf %93, %95 : vector<2x32xf32>
    %99 = arith.addf %97, %98 : vector<2x32xf32>
    %100 = math.tanh %99 : vector<2x32xf32>
    %101 = arith.mulf %96, %100 : vector<2x32xf32>
    %c0_22 = arith.constant 0 : index
    %c2 = arith.constant 2 : index
    %102 = vector.load %arg3[%c0_22, %c2] : memref<2x8xf32, #tpu.memory_space<vmem>>, vector<2x1xf32>
    %103 = vector.broadcast %102 : vector<2x1xf32> to vector<2x32xf32>
    %104 = arith.mulf %103, %99 : vector<2x32xf32>
    %cst_23 = arith.constant 1.000000e+00 : f32
    %105 = vector.broadcast %cst_23 : f32 to vector<2x1xf32>
    %106 = arith.subf %105, %102 : vector<2x1xf32>
    %107 = vector.broadcast %106 : vector<2x1xf32> to vector<2x32xf32>
    %108 = arith.mulf %107, %72 : vector<2x32xf32>
    %109 = arith.addf %104, %108 : vector<2x32xf32>
    %110 = vector.broadcast %102 : vector<2x1xf32> to vector<2x32xf32>
    %111 = arith.mulf %110, %101 : vector<2x32xf32>
    %cst_24 = arith.constant 1.000000e+00 : f32
    %112 = vector.broadcast %cst_24 : f32 to vector<2x1xf32>
    %113 = arith.subf %112, %102 : vector<2x1xf32>
    %114 = vector.broadcast %113 : vector<2x1xf32> to vector<2x32xf32>
    %115 = arith.mulf %114, %79 : vector<2x32xf32>
    %116 = arith.addf %111, %115 : vector<2x32xf32>
    %117 = vector.broadcast %102 : vector<2x1xf32> to vector<2x32xf32>
    %118 = arith.mulf %117, %101 : vector<2x32xf32>
    %c0_25 = arith.constant 0 : index
    %c64 = arith.constant 64 : index
    %119 = vector.load %arg4[%c0_25, %c64] : memref<2x256xf32, #tpu.memory_space<vmem>>, vector<2x32xf32>
    tpu.vector_store %arg4[%c0_25, %c64], %118 {strides = array<i32>} : memref<2x256xf32, #tpu.memory_space<vmem>>, vector<2x32xf32>,
    %c0_26 = arith.constant 0 : index
    %c384 = arith.constant 384 : index
    %120 = vector.load %arg1[%c0_26, %c384] : memref<2x1024xf32, #tpu.memory_space<vmem>>, vector<2x128xf32>
    %cst_27 = arith.constant dense<0.000000e+00> : vector<2x128xf32>
    %121 = tpu.matmul %116, %0, %cst_27 {dimension_numbers = #tpu.dot_dimension_numbers<[1], [0], [0], [1], [0, 0, 1, 1], [], []>} : vector<2x32xf32>, vector<32x128xf32>, vector<2x128xf32> -> vector<2x128xf32>
    %122 = arith.addf %120, %121 : vector<2x128xf32>
    %123 = math.tanh %122 : vector<2x128xf32>
    %124 = arith.negf %122 : vector<2x128xf32>
    %125 = math.exp %124 : vector<2x128xf32>
    %cst_28 = arith.constant 1.000000e+00 : f32
    %126 = vector.broadcast %cst_28 : f32 to vector<2x128xf32>
    %127 = arith.addf %126, %125 : vector<2x128xf32>
    %128 = arith.divf %126, %127 : vector<2x128xf32>
    %129 = arith.select %6, %123, %128 : vector<2x128xi1>, vector<2x128xf32>
    %130 = vector.extract_strided_slice %129 {offsets = [0, 0], sizes = [2, 32], strides = [1, 1]} : vector<2x128xf32> to vector<2x32xf32>
    %131 = vector.extract_strided_slice %129 {offsets = [0, 32], sizes = [2, 32], strides = [1, 1]} : vector<2x128xf32> to vector<2x32xf32>
    %132 = vector.extract_strided_slice %129 {offsets = [0, 64], sizes = [2, 32], strides = [1, 1]} : vector<2x128xf32> to vector<2x32xf32>
    %133 = vector.extract_strided_slice %129 {offsets = [0, 96], sizes = [2, 32], strides = [1, 1]} : vector<2x128xf32> to vector<2x32xf32>
    %134 = arith.mulf %131, %109 : vector<2x32xf32>
    %135 = arith.mulf %130, %132 : vector<2x32xf32>
    %136 = arith.addf %134, %135 : vector<2x32xf32>
    %137 = math.tanh %136 : vector<2x32xf32>
    %138 = arith.mulf %133, %137 : vector<2x32xf32>
    %c0_29 = arith.constant 0 : index
    %c3 = arith.constant 3 : index
    %139 = vector.load %arg3[%c0_29, %c3] : memref<2x8xf32, #tpu.memory_space<vmem>>, vector<2x1xf32>
    %140 = vector.broadcast %139 : vector<2x1xf32> to vector<2x32xf32>
    %141 = arith.mulf %140, %136 : vector<2x32xf32>
    %cst_30 = arith.constant 1.000000e+00 : f32
    %142 = vector.broadcast %cst_30 : f32 to vector<2x1xf32>
    %143 = arith.subf %142, %139 : vector<2x1xf32>
    %144 = vector.broadcast %143 : vector<2x1xf32> to vector<2x32xf32>
    %145 = arith.mulf %144, %109 : vector<2x32xf32>
    %146 = arith.addf %141, %145 : vector<2x32xf32>
    %147 = vector.broadcast %139 : vector<2x1xf32> to vector<2x32xf32>
    %148 = arith.mulf %147, %138 : vector<2x32xf32>
    %cst_31 = arith.constant 1.000000e+00 : f32
    %149 = vector.broadcast %cst_31 : f32 to vector<2x1xf32>
    %150 = arith.subf %149, %139 : vector<2x1xf32>
    %151 = vector.broadcast %150 : vector<2x1xf32> to vector<2x32xf32>
    %152 = arith.mulf %151, %116 : vector<2x32xf32>
    %153 = arith.addf %148, %152 : vector<2x32xf32>
    %154 = vector.broadcast %139 : vector<2x1xf32> to vector<2x32xf32>
    %155 = arith.mulf %154, %138 : vector<2x32xf32>
    %c0_32 = arith.constant 0 : index
    %c96 = arith.constant 96 : index
    %156 = vector.load %arg4[%c0_32, %c96] : memref<2x256xf32, #tpu.memory_space<vmem>>, vector<2x32xf32>
    tpu.vector_store %arg4[%c0_32, %c96], %155 {strides = array<i32>} : memref<2x256xf32, #tpu.memory_space<vmem>>, vector<2x32xf32>,
    %c0_33 = arith.constant 0 : index
    %c512 = arith.constant 512 : index
    %157 = vector.load %arg1[%c0_33, %c512] : memref<2x1024xf32, #tpu.memory_space<vmem>>, vector<2x128xf32>
    %cst_34 = arith.constant dense<0.000000e+00> : vector<2x128xf32>
    %158 = tpu.matmul %153, %0, %cst_34 {dimension_numbers = #tpu.dot_dimension_numbers<[1], [0], [0], [1], [0, 0, 1, 1], [], []>} : vector<2x32xf32>, vector<32x128xf32>, vector<2x128xf32> -> vector<2x128xf32>
    %159 = arith.addf %157, %158 : vector<2x128xf32>
    %160 = math.tanh %159 : vector<2x128xf32>
    %161 = arith.negf %159 : vector<2x128xf32>
    %162 = math.exp %161 : vector<2x128xf32>
    %cst_35 = arith.constant 1.000000e+00 : f32
    %163 = vector.broadcast %cst_35 : f32 to vector<2x128xf32>
    %164 = arith.addf %163, %162 : vector<2x128xf32>
    %165 = arith.divf %163, %164 : vector<2x128xf32>
    %166 = arith.select %6, %160, %165 : vector<2x128xi1>, vector<2x128xf32>
    %167 = vector.extract_strided_slice %166 {offsets = [0, 0], sizes = [2, 32], strides = [1, 1]} : vector<2x128xf32> to vector<2x32xf32>
    %168 = vector.extract_strided_slice %166 {offsets = [0, 32], sizes = [2, 32], strides = [1, 1]} : vector<2x128xf32> to vector<2x32xf32>
    %169 = vector.extract_strided_slice %166 {offsets = [0, 64], sizes = [2, 32], strides = [1, 1]} : vector<2x128xf32> to vector<2x32xf32>
    %170 = vector.extract_strided_slice %166 {offsets = [0, 96], sizes = [2, 32], strides = [1, 1]} : vector<2x128xf32> to vector<2x32xf32>
    %171 = arith.mulf %168, %146 : vector<2x32xf32>
    %172 = arith.mulf %167, %169 : vector<2x32xf32>
    %173 = arith.addf %171, %172 : vector<2x32xf32>
    %174 = math.tanh %173 : vector<2x32xf32>
    %175 = arith.mulf %170, %174 : vector<2x32xf32>
    %c0_36 = arith.constant 0 : index
    %c4 = arith.constant 4 : index
    %176 = vector.load %arg3[%c0_36, %c4] : memref<2x8xf32, #tpu.memory_space<vmem>>, vector<2x1xf32>
    %177 = vector.broadcast %176 : vector<2x1xf32> to vector<2x32xf32>
    %178 = arith.mulf %177, %173 : vector<2x32xf32>
    %cst_37 = arith.constant 1.000000e+00 : f32
    %179 = vector.broadcast %cst_37 : f32 to vector<2x1xf32>
    %180 = arith.subf %179, %176 : vector<2x1xf32>
    %181 = vector.broadcast %180 : vector<2x1xf32> to vector<2x32xf32>
    %182 = arith.mulf %181, %146 : vector<2x32xf32>
    %183 = arith.addf %178, %182 : vector<2x32xf32>
    %184 = vector.broadcast %176 : vector<2x1xf32> to vector<2x32xf32>
    %185 = arith.mulf %184, %175 : vector<2x32xf32>
    %cst_38 = arith.constant 1.000000e+00 : f32
    %186 = vector.broadcast %cst_38 : f32 to vector<2x1xf32>
    %187 = arith.subf %186, %176 : vector<2x1xf32>
    %188 = vector.broadcast %187 : vector<2x1xf32> to vector<2x32xf32>
    %189 = arith.mulf %188, %153 : vector<2x32xf32>
    %190 = arith.addf %185, %189 : vector<2x32xf32>
    %191 = vector.broadcast %176 : vector<2x1xf32> to vector<2x32xf32>
    %192 = arith.mulf %191, %175 : vector<2x32xf32>
    %c0_39 = arith.constant 0 : index
    %c128_40 = arith.constant 128 : index
    %193 = vector.load %arg4[%c0_39, %c128_40] : memref<2x256xf32, #tpu.memory_space<vmem>>, vector<2x32xf32>
    tpu.vector_store %arg4[%c0_39, %c128_40], %192 {strides = array<i32>} : memref<2x256xf32, #tpu.memory_space<vmem>>, vector<2x32xf32>,
    %c0_41 = arith.constant 0 : index
    %c640 = arith.constant 640 : index
    %194 = vector.load %arg1[%c0_41, %c640] : memref<2x1024xf32, #tpu.memory_space<vmem>>, vector<2x128xf32>
    %cst_42 = arith.constant dense<0.000000e+00> : vector<2x128xf32>
    %195 = tpu.matmul %190, %0, %cst_42 {dimension_numbers = #tpu.dot_dimension_numbers<[1], [0], [0], [1], [0, 0, 1, 1], [], []>} : vector<2x32xf32>, vector<32x128xf32>, vector<2x128xf32> -> vector<2x128xf32>
    %196 = arith.addf %194, %195 : vector<2x128xf32>
    %197 = math.tanh %196 : vector<2x128xf32>
    %198 = arith.negf %196 : vector<2x128xf32>
    %199 = math.exp %198 : vector<2x128xf32>
    %cst_43 = arith.constant 1.000000e+00 : f32
    %200 = vector.broadcast %cst_43 : f32 to vector<2x128xf32>
    %201 = arith.addf %200, %199 : vector<2x128xf32>
    %202 = arith.divf %200, %201 : vector<2x128xf32>
    %203 = arith.select %6, %197, %202 : vector<2x128xi1>, vector<2x128xf32>
    %204 = vector.extract_strided_slice %203 {offsets = [0, 0], sizes = [2, 32], strides = [1, 1]} : vector<2x128xf32> to vector<2x32xf32>
    %205 = vector.extract_strided_slice %203 {offsets = [0, 32], sizes = [2, 32], strides = [1, 1]} : vector<2x128xf32> to vector<2x32xf32>
    %206 = vector.extract_strided_slice %203 {offsets = [0, 64], sizes = [2, 32], strides = [1, 1]} : vector<2x128xf32> to vector<2x32xf32>
    %207 = vector.extract_strided_slice %203 {offsets = [0, 96], sizes = [2, 32], strides = [1, 1]} : vector<2x128xf32> to vector<2x32xf32>
    %208 = arith.mulf %205, %183 : vector<2x32xf32>
    %209 = arith.mulf %204, %206 : vector<2x32xf32>
    %210 = arith.addf %208, %209 : vector<2x32xf32>
    %211 = math.tanh %210 : vector<2x32xf32>
    %212 = arith.mulf %207, %211 : vector<2x32xf32>
    %c0_44 = arith.constant 0 : index
    %c5 = arith.constant 5 : index
    %213 = vector.load %arg3[%c0_44, %c5] : memref<2x8xf32, #tpu.memory_space<vmem>>, vector<2x1xf32>
    %214 = vector.broadcast %213 : vector<2x1xf32> to vector<2x32xf32>
    %215 = arith.mulf %214, %210 : vector<2x32xf32>
    %cst_45 = arith.constant 1.000000e+00 : f32
    %216 = vector.broadcast %cst_45 : f32 to vector<2x1xf32>
    %217 = arith.subf %216, %213 : vector<2x1xf32>
    %218 = vector.broadcast %217 : vector<2x1xf32> to vector<2x32xf32>
    %219 = arith.mulf %218, %183 : vector<2x32xf32>
    %220 = arith.addf %215, %219 : vector<2x32xf32>
    %221 = vector.broadcast %213 : vector<2x1xf32> to vector<2x32xf32>
    %222 = arith.mulf %221, %212 : vector<2x32xf32>
    %cst_46 = arith.constant 1.000000e+00 : f32
    %223 = vector.broadcast %cst_46 : f32 to vector<2x1xf32>
    %224 = arith.subf %223, %213 : vector<2x1xf32>
    %225 = vector.broadcast %224 : vector<2x1xf32> to vector<2x32xf32>
    %226 = arith.mulf %225, %190 : vector<2x32xf32>
    %227 = arith.addf %222, %226 : vector<2x32xf32>
    %228 = vector.broadcast %213 : vector<2x1xf32> to vector<2x32xf32>
    %229 = arith.mulf %228, %212 : vector<2x32xf32>
    %c0_47 = arith.constant 0 : index
    %c160 = arith.constant 160 : index
    %230 = vector.load %arg4[%c0_47, %c160] : memref<2x256xf32, #tpu.memory_space<vmem>>, vector<2x32xf32>
    tpu.vector_store %arg4[%c0_47, %c160], %229 {strides = array<i32>} : memref<2x256xf32, #tpu.memory_space<vmem>>, vector<2x32xf32>,
    %c0_48 = arith.constant 0 : index
    %c768 = arith.constant 768 : index
    %231 = vector.load %arg1[%c0_48, %c768] : memref<2x1024xf32, #tpu.memory_space<vmem>>, vector<2x128xf32>
    %cst_49 = arith.constant dense<0.000000e+00> : vector<2x128xf32>
    %232 = tpu.matmul %227, %0, %cst_49 {dimension_numbers = #tpu.dot_dimension_numbers<[1], [0], [0], [1], [0, 0, 1, 1], [], []>} : vector<2x32xf32>, vector<32x128xf32>, vector<2x128xf32> -> vector<2x128xf32>
    %233 = arith.addf %231, %232 : vector<2x128xf32>
    %234 = math.tanh %233 : vector<2x128xf32>
    %235 = arith.negf %233 : vector<2x128xf32>
    %236 = math.exp %235 : vector<2x128xf32>
    %cst_50 = arith.constant 1.000000e+00 : f32
    %237 = vector.broadcast %cst_50 : f32 to vector<2x128xf32>
    %238 = arith.addf %237, %236 : vector<2x128xf32>
    %239 = arith.divf %237, %238 : vector<2x128xf32>
    %240 = arith.select %6, %234, %239 : vector<2x128xi1>, vector<2x128xf32>
    %241 = vector.extract_strided_slice %240 {offsets = [0, 0], sizes = [2, 32], strides = [1, 1]} : vector<2x128xf32> to vector<2x32xf32>
    %242 = vector.extract_strided_slice %240 {offsets = [0, 32], sizes = [2, 32], strides = [1, 1]} : vector<2x128xf32> to vector<2x32xf32>
    %243 = vector.extract_strided_slice %240 {offsets = [0, 64], sizes = [2, 32], strides = [1, 1]} : vector<2x128xf32> to vector<2x32xf32>
    %244 = vector.extract_strided_slice %240 {offsets = [0, 96], sizes = [2, 32], strides = [1, 1]} : vector<2x128xf32> to vector<2x32xf32>
    %245 = arith.mulf %242, %220 : vector<2x32xf32>
    %246 = arith.mulf %241, %243 : vector<2x32xf32>
    %247 = arith.addf %245, %246 : vector<2x32xf32>
    %248 = math.tanh %247 : vector<2x32xf32>
    %249 = arith.mulf %244, %248 : vector<2x32xf32>
    %c0_51 = arith.constant 0 : index
    %c6 = arith.constant 6 : index
    %250 = vector.load %arg3[%c0_51, %c6] : memref<2x8xf32, #tpu.memory_space<vmem>>, vector<2x1xf32>
    %251 = vector.broadcast %250 : vector<2x1xf32> to vector<2x32xf32>
    %252 = arith.mulf %251, %247 : vector<2x32xf32>
    %cst_52 = arith.constant 1.000000e+00 : f32
    %253 = vector.broadcast %cst_52 : f32 to vector<2x1xf32>
    %254 = arith.subf %253, %250 : vector<2x1xf32>
    %255 = vector.broadcast %254 : vector<2x1xf32> to vector<2x32xf32>
    %256 = arith.mulf %255, %220 : vector<2x32xf32>
    %257 = arith.addf %252, %256 : vector<2x32xf32>
    %258 = vector.broadcast %250 : vector<2x1xf32> to vector<2x32xf32>
    %259 = arith.mulf %258, %249 : vector<2x32xf32>
    %cst_53 = arith.constant 1.000000e+00 : f32
    %260 = vector.broadcast %cst_53 : f32 to vector<2x1xf32>
    %261 = arith.subf %260, %250 : vector<2x1xf32>
    %262 = vector.broadcast %261 : vector<2x1xf32> to vector<2x32xf32>
    %263 = arith.mulf %262, %227 : vector<2x32xf32>
    %264 = arith.addf %259, %263 : vector<2x32xf32>
    %265 = vector.broadcast %250 : vector<2x1xf32> to vector<2x32xf32>
    %266 = arith.mulf %265, %249 : vector<2x32xf32>
    %c0_54 = arith.constant 0 : index
    %c192 = arith.constant 192 : index
    %267 = vector.load %arg4[%c0_54, %c192] : memref<2x256xf32, #tpu.memory_space<vmem>>, vector<2x32xf32>
    tpu.vector_store %arg4[%c0_54, %c192], %266 {strides = array<i32>} : memref<2x256xf32, #tpu.memory_space<vmem>>, vector<2x32xf32>,
    %c0_55 = arith.constant 0 : index
    %c896 = arith.constant 896 : index
    %268 = vector.load %arg1[%c0_55, %c896] : memref<2x1024xf32, #tpu.memory_space<vmem>>, vector<2x128xf32>
    %cst_56 = arith.constant dense<0.000000e+00> : vector<2x128xf32>
    %269 = tpu.matmul %264, %0, %cst_56 {dimension_numbers = #tpu.dot_dimension_numbers<[1], [0], [0], [1], [0, 0, 1, 1], [], []>} : vector<2x32xf32>, vector<32x128xf32>, vector<2x128xf32> -> vector<2x128xf32>
    %270 = arith.addf %268, %269 : vector<2x128xf32>
    %271 = math.tanh %270 : vector<2x128xf32>
    %272 = arith.negf %270 : vector<2x128xf32>
    %273 = math.exp %272 : vector<2x128xf32>
    %cst_57 = arith.constant 1.000000e+00 : f32
    %274 = vector.broadcast %cst_57 : f32 to vector<2x128xf32>
    %275 = arith.addf %274, %273 : vector<2x128xf32>
    %276 = arith.divf %274, %275 : vector<2x128xf32>
    %277 = arith.select %6, %271, %276 : vector<2x128xi1>, vector<2x128xf32>
    %278 = vector.extract_strided_slice %277 {offsets = [0, 0], sizes = [2, 32], strides = [1, 1]} : vector<2x128xf32> to vector<2x32xf32>
    %279 = vector.extract_strided_slice %277 {offsets = [0, 32], sizes = [2, 32], strides = [1, 1]} : vector<2x128xf32> to vector<2x32xf32>
    %280 = vector.extract_strided_slice %277 {offsets = [0, 64], sizes = [2, 32], strides = [1, 1]} : vector<2x128xf32> to vector<2x32xf32>
    %281 = vector.extract_strided_slice %277 {offsets = [0, 96], sizes = [2, 32], strides = [1, 1]} : vector<2x128xf32> to vector<2x32xf32>
    %282 = arith.mulf %279, %257 : vector<2x32xf32>
    %283 = arith.mulf %278, %280 : vector<2x32xf32>
    %284 = arith.addf %282, %283 : vector<2x32xf32>
    %285 = math.tanh %284 : vector<2x32xf32>
    %286 = arith.mulf %281, %285 : vector<2x32xf32>
    %c0_58 = arith.constant 0 : index
    %c7 = arith.constant 7 : index
    %287 = vector.load %arg3[%c0_58, %c7] : memref<2x8xf32, #tpu.memory_space<vmem>>, vector<2x1xf32>
    %288 = vector.broadcast %287 : vector<2x1xf32> to vector<2x32xf32>
    %289 = arith.mulf %288, %286 : vector<2x32xf32>
    %cst_59 = arith.constant 1.000000e+00 : f32
    %290 = vector.broadcast %cst_59 : f32 to vector<2x1xf32>
    %291 = arith.subf %290, %287 : vector<2x1xf32>
    %292 = vector.broadcast %291 : vector<2x1xf32> to vector<2x32xf32>
    %293 = arith.mulf %292, %264 : vector<2x32xf32>
    %294 = arith.addf %289, %293 : vector<2x32xf32>
    %295 = vector.broadcast %287 : vector<2x1xf32> to vector<2x32xf32>
    %296 = arith.mulf %295, %286 : vector<2x32xf32>
    %c0_60 = arith.constant 0 : index
    %c224 = arith.constant 224 : index
    %297 = vector.load %arg4[%c0_60, %c224] : memref<2x256xf32, #tpu.memory_space<vmem>>, vector<2x32xf32>
    tpu.vector_store %arg4[%c0_60, %c224], %296 {strides = array<i32>} : memref<2x256xf32, #tpu.memory_space<vmem>>, vector<2x32xf32>,
    %c0_61 = arith.constant 0 : index
    %c0_62 = arith.constant 0 : index
    %298 = vector.load %arg5[%c0_61, %c0_62] : memref<2x32xf32, #tpu.memory_space<vmem>>, vector<2x32xf32>
    tpu.vector_store %arg5[%c0_61, %c0_62], %294 {strides = array<i32>} : memref<2x32xf32, #tpu.memory_space<vmem>>, vector<2x32xf32>,
    return
  }
  func.func @transform_0(%arg0: i32) -> (i32, i32) {
    %c0_i32 = arith.constant 0 : i32
    %c0_i32_0 = arith.constant 0 : i32
    %c0_i32_1 = arith.constant 0 : i32
    return %c0_i32, %c0_i32_0 : i32, i32
  }
  func.func @transform_1(%arg0: i32) -> (i32, i32) {
    %c0_i32 = arith.constant 0 : i32
    %c0_i32_0 = arith.constant 0 : i32
    %c0_i32_1 = arith.constant 0 : i32
    return %c0_i32, %c0_i32_0 : i32, i32
  }
  func.func @transform_2(%arg0: i32) -> (i32, i32) {
    %c0_i32 = arith.constant 0 : i32
    %c0_i32_0 = arith.constant 0 : i32
    %c0_i32_1 = arith.constant 0 : i32
    return %c0_i32, %c0_i32_0 : i32, i32
  }
  func.func @transform_3(%arg0: i32) -> (i32, i32) {
    %c0_i32 = arith.constant 0 : i32
    %c0_i32_0 = arith.constant 0 : i32
    %c0_i32_1 = arith.constant 0 : i32
    return %c0_i32, %c0_i32_0 : i32, i32
  }
  func.func @transform_4(%arg0: i32) -> (i32, i32) {
    %c0_i32 = arith.constant 0 : i32
    %c0_i32_0 = arith.constant 0 : i32
    %c0_i32_1 = arith.constant 0 : i32
    return %c0_i32, %c0_i32_0 : i32, i32
  }
}

</mosaic_0001>

<llo_original>
// kernel: tpu_custom_call.1
$region0: #{tpu_custom_call.1}
  #allocation0 [shape = 'u32[]', space=smem, size = 0x4, offset = 0x4, fixed_abs, tag = 'smem constant byte address 0x4 - core index']
  #allocation1 [shape = 'u32[144,128]{1,0:T(1,128)}', space=vmem, size = 0x12000, scoped, tag = 'internal scratch']
  %s0 = inlined_call_operand.hbm [shape: f32[2,1024], index: 0, kind: input, shape index: {}]
  %s1 = inlined_call_operand.hbm [shape: f32[32,128], index: 1, kind: input, shape index: {}]
  %s2 = inlined_call_operand.vmem [shape: f32[2,8], index: 2, kind: input, shape index: {}]
  %s3 = inlined_call_operand.hbm [shape: f32[2,256], index: 3, kind: output, shape index: {0}]
  %s4 = inlined_call_operand.hbm [shape: f32[2,32], index: 4, kind: output, shape index: {1}]
  %5 = xla_tuple %s3, %s4
  %s6 = sld [smem:[#allocation0]]
  $region38: #{tpu_custom_call.1} parent=0
    _
  %s8 = ssub.s32 1, %s6
  %s9 = scalar_select 0, %s8, %s6
  $region1: #{tpu_custom_call.1} parent=0
    #allocation2 [shape = 'u8[8192]{0}', space=vmem, size = 0x2000, scoped, tag = 'input window, operand 0, single buffered']
    #allocation3 [shape = 's32[1]{0}', space=sflag, size = 0x4, scoped, tag = 'scoped memory for tpu_custom_call.1']
    #allocation4 [shape = 's32[1]{0}', space=sflag, size = 0x4, scoped, tag = 'scoped memory for tpu_custom_call.1']
    #allocation5 [shape = 'u8[16384]{0}', space=vmem, size = 0x4000, scoped, tag = 'input window, operand 1, single buffered']
    #allocation6 [shape = 's32[1]{0}', space=sflag, size = 0x4, scoped, tag = 'scoped memory for tpu_custom_call.1']
    #allocation7 [shape = 'u8[2048]{0}', space=vmem, size = 0x800, scoped, tag = 'output window, operand 0, single buffered']
    #allocation8 [shape = 'u8[1024]{0}', space=vmem, size = 0x400, scoped, tag = 'output window, operand 1, single buffered']
    #allocation9 [shape = 's32[1]{0}', space=sflag, size = 0x4, scoped, tag = 'scoped memory for tpu_custom_call.1']
    %10 = vsyncpa [#allocation3], 0
    %11 = vsyncpa [#allocation6], 0
    %12 = vsyncpa [#allocation4], 0
    %13 = vsyncpa [#allocation9], 0
    // Predicated region
    $region2: #{tpu_custom_call.1} parent=1 // pred_check
      _
    $region3: #{tpu_custom_call.1} parent=1 // pred_check_branch
      %15 = sbr.rel (0) target = $region5
    $region4: #{tpu_custom_call.1} parent=1 // pred_region
      %s17 = ssub.s32 256, 256
      %18 = vsyncadd [#allocation3], %s17
      %s20 = sshll.u32 [#allocation2], 4
      %s21 = int_to_ptr.vmem [resolvable:$true] %s20
      %23 = dma.hbm_to_vmem [thread:$0]  %s0, 256, %s21, [#allocation3]
    $region5: #{tpu_custom_call.1} parent=1 // pred_fallthru
      _
    // Predicated region
    $region6: #{tpu_custom_call.1} parent=1 // pred_check
      _
    $region7: #{tpu_custom_call.1} parent=1 // pred_check_branch
      %25 = sbr.rel (0) target = $region9
    $region8: #{tpu_custom_call.1} parent=1 // pred_region
      %s27 = ssub.s32 512, 512
      %28 = vsyncadd [#allocation6], %s27
      %s29 = sshll.u32 [#allocation5], 4
      %s30 = int_to_ptr.vmem [resolvable:$true] %s29
      %35 = dma.hbm_to_vmem [thread:$0]  %s1, 512, %s30, [#allocation6], 128, 128, 8
    $region9: #{tpu_custom_call.1} parent=1 // pred_fallthru
      _
    // Predicated region
    $region10: #{tpu_custom_call.1} parent=1 // pred_check
      _
    $region11: #{tpu_custom_call.1} parent=1 // pred_check_branch
      %37 = sbr.rel (0) target = $region13
    $region12: #{tpu_custom_call.1} parent=1 // pred_region
      _
    $region13: #{tpu_custom_call.1} parent=1 // pred_fallthru
      _
    // Predicated region
    $region14: #{tpu_custom_call.1} parent=1 // pred_check
      _
    $region15: #{tpu_custom_call.1} parent=1 // pred_check_branch
      %39 = sbr.rel (0) target = $region17
    $region16: #{tpu_custom_call.1} parent=1 // pred_region
      %40 = dma.done [#allocation3], 256
    $region17: #{tpu_custom_call.1} parent=1 // pred_fallthru
      _
    // Predicated region
    $region18: #{tpu_custom_call.1} parent=1 // pred_check
      _
    $region19: #{tpu_custom_call.1} parent=1 // pred_check_branch
      %42 = sbr.rel (0) target = $region21
    $region20: #{tpu_custom_call.1} parent=1 // pred_region
      %43 = dma.done [#allocation6], 512
    $region21: #{tpu_custom_call.1} parent=1 // pred_fallthru
      _
    %v44 = vld [vmem:[#allocation5] sm:$0xff]
    %v45 = vld [vmem:[#allocation5 + $0x8] sm:$0xff]
    %v46 = vld [vmem:[#allocation5 + $0x10] sm:$0xff]
    %v47 = vld [vmem:[#allocation5 + $0x18] sm:$0xff]
    %v48 = vlaneseq
    %v49 = vand.u32 %v48, 127
    %vm50 = vcmp.ge.s32.totalorder %v49, 64
    %vm51 = vcmp.lt.s32.totalorder %v49, 96
    %vm52 = vmand %vm50, %vm51
    %v53 = vld [vmem:[#allocation2] sm:$0x3]
    %vm54 = vcmask 261120
    %v56 = vsel %vm54, 0.0, 0
    %58 = vmatprep.subr.mxu0 0.0
    %59 = vmatpush1.msra.mxu0 %v44
    %60 = vmatprep.subr.mxu0 0.0
    %61 = vmatpush1.msra.mxu0 %v45
    %62 = vmatprep.subr.mxu0 0.0
    %63 = vmatpush1.msra.mxu0 %v46
    %64 = vmatprep.subr.mxu0 0.0
    %65 = vmatpush1.msra.mxu0 %v47
    %66 = vmatprep.subr.mxu0 0.0
    %67 = vmatpush1.msra.mxu0 0.0
    %68 = vmatprep.subr.mxu0 0.0
    %69 = vmatpush1.msra.mxu0 0.0
    %70 = vmatprep.subr.mxu0 0.0
    %71 = vmatpush1.msra.mxu0 0.0
    %72 = vmatprep.subr.mxu0 0.0
    %73 = vmatpush1.msra.mxu0 0.0
    %74 = vmatprep.subr.mxu0 0.0
    %75 = vmatpush1.msra.mxu0 0.0
    %76 = vmatprep.subr.mxu0 0.0
    %77 = vmatpush1.msra.mxu0 0.0
    %78 = vmatprep.subr.mxu0 0.0
    %79 = vmatpush1.msra.mxu0 0.0
    %80 = vmatprep.subr.mxu0 0.0
    %81 = vmatpush1.msra.mxu0 0.0
    %82 = vmatprep.subr.mxu0 0.0
    %83 = vmatpush1.msra.mxu0 0.0
    %84 = vmatprep.subr.mxu0 0.0
    %85 = vmatpush1.msra.mxu0 0.0
    %86 = vmatprep.subr.mxu0 0.0
    %87 = vmatpush1.msra.mxu0 0.0
    %88 = vmatprep.subr.mxu0 0.0
    %89 = vmatpush1.msra.mxu0 0.0
    %90 = vmatprep.subr.mxu0 0.0
    %91 = vmatpush1.msra.mxu0 0.0
    %92 = vmatprep.subr.mxu0 0.0
    %93 = vmatpush1.msra.mxu0 0.0
    %94 = vmatprep.subr.mxu0 0.0
    %95 = vmatpush1.msra.mxu0 0.0
    %96 = vmatprep.subr.mxu0 0.0
    %97 = vmatpush1.msra.mxu0 0.0
    %98 = vmatprep.subr.mxu0 0.0
    %99 = vmatpush1.msra.mxu0 0.0
    %100 = vmatprep.subr.mxu0 0.0
    %101 = vmatpush1.msra.mxu0 0.0
    %102 = vmatprep.subr.mxu0 0.0
    %103 = vmatpush1.msra.mxu0 0.0
    %104 = vmatprep.subr.mxu0 0.0
    %105 = vmatpush1.msra.mxu0 0.0
    %106 = vmatprep.subr.mxu0 0.0
    %107 = vmatpush1.msra.mxu0 0.0
    %108 = vmatprep.subr.mxu0 0.0
    %109 = vmatpush1.msra.mxu0 0.0
    %110 = vmatprep.subr.mxu0 0.0
    %111 = vmatpush1.msra.mxu0 0.0
    %112 = vmatprep.subr.mxu0 0.0
    %113 = vmatpush1.msra.mxu0 0.0
    %114 = vmatprep.subr.mxu0 0.0
    %115 = vmatpush1.msra.mxu0 0.0
    %116 = vmatprep.subr.mxu0 0.0
    %117 = vmatpush1.msra.mxu0 0.0
    %118 = vmatprep.subr.mxu0 0.0
    %119 = vmatpush1.msra.mxu0 0.0
    %120 = vmatprep.subr.mxu0 0.0
    %121 = vmatpush1.msra.mxu0 0.0
    %122 = vmatprep.mubr.f32.mxu0 0.0
    %123 = vmatmul.mubr.f32.gmra.mrb[0].mxu0 %v56
    %v124 = vpop.f32.mrb[0].mxu0
    %v125 = vadd.f32 0.0, %v124
    %v126 = vpop.f32.mrb[0].mxu0
    %127 = vdwg.mxu0
    %v128 = vadd.f32 %v53, %v125
    %v129 = vtanh.pop %v128
    %v130 = vxor.u32 %v128, 2147483648
    %v131 = vmul.f32 %v130, 1.442695
    %v132 = vpow.pop %v131
    %v133 = vadd.f32 %v132, 1.0
    %v134 = vrcp.pop %v133
    %v135 = vmul.f32 1.0, %v134
    %v136 = vsel %vm52, %v129, %v135
    %v137 = vmul.f32 %v136, 0.0
    %139 = vrot.lane.b32.xlu0 %v136, 64
    %v140 = vpop.permute.xlu0 %139
    %v142 = vmul.f32 %v136, %v140
    %144 = vrot.lane.b32.xlu0 %v142, 32
    %v145 = vpop.permute.xlu0 %144
    %v147 = vadd.f32 %v137, %v145
    %v148 = vtanh.pop %v147
    %150 = vrot.lane.b32.xlu0 %v148, 64
    %v151 = vpop.permute.xlu0 %150
    %v153 = vmul.f32 %v136, %v151
    %v154 = vld [vmem:[%s2] sm:$0x3]
    %156 = vset.pattern.permute.xlu0 0
    %157 = vperm.xlu0 %156, %v154
    %v158 = vpop.permute.xlu0 %157
    %v160 = vmul.f32 %v158, %v147
    %v161 = vsub.f32 1.0, %v154
    %163 = vset.pattern.permute.xlu0 0
    %164 = vperm.xlu0 %163, %v161
    %v165 = vpop.permute.xlu0 %164
    %v167 = vmul.f32 %v165, 0.0
    %v168 = vadd.f32 %v160, %v167
    %v169 = vmul.f32 %v158, %v153
    %v170 = vadd.f32 %v169, %v167
    %v173 = vunpack.c.l.s4 1983009808
    %v174 = vunpack.c.0.s8 %v173
    %v175 = vlaneseq
    %v176 = vshrl.u32 %v175, 7
    %v177 = vsub.s32 %v174, %v176
    %v178 = vrot.slane %v169, %v177
    %179 = vrot.lane.b32.xlu0 %v178, 32
    %v180 = vpop.permute.xlu0 %179
    %vm182 = vcmask 254976
    %183 = vst.msk [vmem:[#allocation7] sm:$0x3] %vm182, %v180
    %v184 = vld [vmem:[#allocation2 + $0x2] sm:$0x3]
    %186 = vrot.lane.b32.xlu0 %v170, 32
    %v187 = vpop.permute.xlu0 %186
    %v188 = vsel %vm54, %v187, 0
    %190 = vmatprep.subr.mxu0 0.0
    %191 = vmatpush1.msra.mxu0 %v44
    %192 = vmatprep.subr.mxu0 0.0
    %193 = vmatpush1.msra.mxu0 %v45
    %194 = vmatprep.subr.mxu0 0.0
    %195 = vmatpush1.msra.mxu0 %v46
    %196 = vmatprep.subr.mxu0 0.0
    %197 = vmatpush1.msra.mxu0 %v47
    %198 = vmatprep.subr.mxu0 0.0
    %199 = vmatpush1.msra.mxu0 0.0
    %200 = vmatprep.subr.mxu0 0.0
    %201 = vmatpush1.msra.mxu0 0.0
    %202 = vmatprep.subr.mxu0 0.0
    %203 = vmatpush1.msra.mxu0 0.0
    %204 = vmatprep.subr.mxu0 0.0
    %205 = vmatpush1.msra.mxu0 0.0
    %206 = vmatprep.subr.mxu0 0.0
    %207 = vmatpush1.msra.mxu0 0.0
    %208 = vmatprep.subr.mxu0 0.0
    %209 = vmatpush1.msra.mxu0 0.0
    %210 = vmatprep.subr.mxu0 0.0
    %211 = vmatpush1.msra.mxu0 0.0
    %212 = vmatprep.subr.mxu0 0.0
    %213 = vmatpush1.msra.mxu0 0.0
    %214 = vmatprep.subr.mxu0 0.0
    %215 = vmatpush1.msra.mxu0 0.0
    %216 = vmatprep.subr.mxu0 0.0
    %217 = vmatpush1.msra.mxu0 0.0
    %218 = vmatprep.subr.mxu0 0.0
    %219 = vmatpush1.msra.mxu0 0.0
    %220 = vmatprep.subr.mxu0 0.0
    %221 = vmatpush1.msra.mxu0 0.0
    %222 = vmatprep.subr.mxu0 0.0
    %223 = vmatpush1.msra.mxu0 0.0
    %224 = vmatprep.subr.mxu0 0.0
    %225 = vmatpush1.msra.mxu0 0.0
    %226 = vmatprep.subr.mxu0 0.0
    %227 = vmatpush1.msra.mxu0 0.0
    %228 = vmatprep.subr.mxu0 0.0
    %229 = vmatpush1.msra.mxu0 0.0
    %230 = vmatprep.subr.mxu0 0.0
    %231 = vmatpush1.msra.mxu0 0.0
    %232 = vmatprep.subr.mxu0 0.0
    %233 = vmatpush1.msra.mxu0 0.0
    %234 = vmatprep.subr.mxu0 0.0
    %235 = vmatpush1.msra.mxu0 0.0
    %236 = vmatprep.subr.mxu0 0.0
    %237 = vmatpush1.msra.mxu0 0.0
    %238 = vmatprep.subr.mxu0 0.0
    %239 = vmatpush1.msra.mxu0 0.0
    %240 = vmatprep.subr.mxu0 0.0
    %241 = vmatpush1.msra.mxu0 0.0
    %242 = vmatprep.subr.mxu0 0.0
    %243 = vmatpush1.msra.mxu0 0.0
    %244 = vmatprep.subr.mxu0 0.0
    %245 = vmatpush1.msra.mxu0 0.0
    %246 = vmatprep.subr.mxu0 0.0
    %247 = vmatpush1.msra.mxu0 0.0
    %248 = vmatprep.subr.mxu0 0.0
    %249 = vmatpush1.msra.mxu0 0.0
    %250 = vmatprep.subr.mxu0 0.0
    %251 = vmatpush1.msra.mxu0 0.0
    %252 = vmatprep.subr.mxu0 0.0
    %253 = vmatpush1.msra.mxu0 0.0
    %254 = vmatprep.mubr.f32.mxu0 0.0
    %255 = vmatmul.mubr.f32.gmra.mrb[0].mxu0 %v188
    %v256 = vpop.f32.mrb[0].mxu0
    %v257 = vadd.f32 0.0, %v256
    %v258 = vpop.f32.mrb[0].mxu0
    %259 = vdwg.mxu0
    %v260 = vadd.f32 %v184, %v257
    %v261 = vtanh.pop %v260
    %v262 = vxor.u32 %v260, 2147483648
    %v263 = vmul.f32 %v262, 1.442695
    %v264 = vpow.pop %v263
    %v265 = vadd.f32 %v264, 1.0
    %v266 = vrcp.pop %v265
    %v267 = vmul.f32 1.0, %v266
    %v268 = vsel %vm52, %v261, %v267
    %v269 = vmul.f32 %v268, %v168
    %271 = vrot.lane.b32.xlu0 %v268, 64
    %v272 = vpop.permute.xlu0 %271
    %v274 = vmul.f32 %v268, %v272
    %276 = vrot.lane.b32.xlu0 %v274, 32
    %v277 = vpop.permute.xlu0 %276
    %v279 = vadd.f32 %v269, %v277
    %v280 = vtanh.pop %v279
    %282 = vrot.lane.b32.xlu0 %v280, 64
    %v283 = vpop.permute.xlu0 %282
    %v285 = vmul.f32 %v268, %v283
    %v286 = vld [vmem:[%s2] sm:$0x3]
    %288 = vset.pattern.permute.xlu0 1
    %289 = vperm.xlu0 %288, %v286
    %v290 = vpop.permute.xlu0 %289
    %v292 = vmul.f32 %v290, %v279
    %v293 = vsub.f32 1.0, %v286
    %295 = vset.pattern.permute.xlu0 1
    %296 = vperm.xlu0 %295, %v293
    %v297 = vpop.permute.xlu0 %296
    %v299 = vmul.f32 %v297, %v168
    %v300 = vadd.f32 %v292, %v299
    %v301 = vmul.f32 %v290, %v285
    %v302 = vmul.f32 %v297, %v170
    %v303 = vadd.f32 %v301, %v302
    %v306 = vunpack.c.l.s4 1983009808
    %v307 = vunpack.c.0.s8 %v306
    %v308 = vlaneseq
    %v309 = vshrl.u32 %v308, 7
    %v310 = vsub.s32 %v307, %v309
    %v311 = vrot.slane %v301, %v310
    %312 = vrot.lane.b32.xlu0 %v311, 64
    %v313 = vpop.permute.xlu0 %312
    %vm315 = vcmask 517376
    %316 = vst.msk [vmem:[#allocation7] sm:$0x3] %vm315, %v313
    %v317 = vld [vmem:[#allocation2 + $0x4] sm:$0x3]
    %319 = vrot.lane.b32.xlu0 %v303, 32
    %v320 = vpop.permute.xlu0 %319
    %v321 = vsel %vm54, %v320, 0
    %323 = vmatprep.subr.mxu0 0.0
    %324 = vmatpush1.msra.mxu0 %v44
    %325 = vmatprep.subr.mxu0 0.0
    %326 = vmatpush1.msra.mxu0 %v45
    %327 = vmatprep.subr.mxu0 0.0
    %328 = vmatpush1.msra.mxu0 %v46
    %329 = vmatprep.subr.mxu0 0.0
    %330 = vmatpush1.msra.mxu0 %v47
    %331 = vmatprep.subr.mxu0 0.0
    %332 = vmatpush1.msra.mxu0 0.0
    %333 = vmatprep.subr.mxu0 0.0
    %334 = vmatpush1.msra.mxu0 0.0
    %335 = vmatprep.subr.mxu0 0.0
    %336 = vmatpush1.msra.mxu0 0.0
    %337 = vmatprep.subr.mxu0 0.0
    %338 = vmatpush1.msra.mxu0 0.0
    %339 = vmatprep.subr.mxu0 0.0
    %340 = vmatpush1.msra.mxu0 0.0
    %341 = vmatprep.subr.mxu0 0.0
    %342 = vmatpush1.msra.mxu0 0.0
    %343 = vmatprep.subr.mxu0 0.0
    %344 = vmatpush1.msra.mxu0 0.0
    %345 = vmatprep.subr.mxu0 0.0
    %346 = vmatpush1.msra.mxu0 0.0
    %347 = vmatprep.subr.mxu0 0.0
    %348 = vmatpush1.msra.mxu0 0.0
    %349 = vmatprep.subr.mxu0 0.0
    %350 = vmatpush1.msra.mxu0 0.0
    %351 = vmatprep.subr.mxu0 0.0
    %352 = vmatpush1.msra.mxu0 0.0
    %353 = vmatprep.subr.mxu0 0.0
    %354 = vmatpush1.msra.mxu0 0.0
    %355 = vmatprep.subr.mxu0 0.0
    %356 = vmatpush1.msra.mxu0 0.0
    %357 = vmatprep.subr.mxu0 0.0
    %358 = vmatpush1.msra.mxu0 0.0
    %359 = vmatprep.subr.mxu0 0.0
    %360 = vmatpush1.msra.mxu0 0.0
    %361 = vmatprep.subr.mxu0 0.0
    %362 = vmatpush1.msra.mxu0 0.0
    %363 = vmatprep.subr.mxu0 0.0
    %364 = vmatpush1.msra.mxu0 0.0
    %365 = vmatprep.subr.mxu0 0.0
    %366 = vmatpush1.msra.mxu0 0.0
    %367 = vmatprep.subr.mxu0 0.0
    %368 = vmatpush1.msra.mxu0 0.0
    %369 = vmatprep.subr.mxu0 0.0
    %370 = vmatpush1.msra.mxu0 0.0
    %371 = vmatprep.subr.mxu0 0.0
    %372 = vmatpush1.msra.mxu0 0.0
    %373 = vmatprep.subr.mxu0 0.0
    %374 = vmatpush1.msra.mxu0 0.0
    %375 = vmatprep.subr.mxu0 0.0
    %376 = vmatpush1.msra.mxu0 0.0
    %377 = vmatprep.subr.mxu0 0.0
    %378 = vmatpush1.msra.mxu0 0.0
    %379 = vmatprep.subr.mxu0 0.0
    %380 = vmatpush1.msra.mxu0 0.0
    %381 = vmatprep.subr.mxu0 0.0
    %382 = vmatpush1.msra.mxu0 0.0
    %383 = vmatprep.subr.mxu0 0.0
    %384 = vmatpush1.msra.mxu0 0.0
    %385 = vmatprep.subr.mxu0 0.0
    %386 = vmatpush1.msra.mxu0 0.0
    %387 = vmatprep.mubr.f32.mxu0 0.0
    %388 = vmatmul.mubr.f32.gmra.mrb[0].mxu0 %v321
    %v389 = vpop.f32.mrb[0].mxu0
    %v390 = vadd.f32 0.0, %v389
    %v391 = vpop.f32.mrb[0].mxu0
    %392 = vdwg.mxu0
    %v393 = vadd.f32 %v317, %v390
    %v394 = vtanh.pop %v393
    %v395 = vxor.u32 %v393, 2147483648
    %v396 = vmul.f32 %v395, 1.442695
    %v397 = vpow.pop %v396
    %v398 = vadd.f32 %v397, 1.0
    %v399 = vrcp.pop %v398
    %v400 = vmul.f32 1.0, %v399
    %v401 = vsel %vm52, %v394, %v400
    %v402 = vmul.f32 %v401, %v300
    %404 = vrot.lane.b32.xlu0 %v401, 64
    %v405 = vpop.permute.xlu0 %404
    %v407 = vmul.f32 %v401, %v405
    %409 = vrot.lane.b32.xlu0 %v407, 32
    %v410 = vpop.permute.xlu0 %409
    %v412 = vadd.f32 %v402, %v410
    %v413 = vtanh.pop %v412
    %415 = vrot.lane.b32.xlu0 %v413, 64
    %v416 = vpop.permute.xlu0 %415
    %v418 = vmul.f32 %v401, %v416
    %v419 = vld [vmem:[%s2] sm:$0x3]
    %421 = vset.pattern.permute.xlu0 2
    %422 = vperm.xlu0 %421, %v419
    %v423 = vpop.permute.xlu0 %422
    %v425 = vmul.f32 %v423, %v412
    %v426 = vsub.f32 1.0, %v419
    %428 = vset.pattern.permute.xlu0 2
    %429 = vperm.xlu0 %428, %v426
    %v430 = vpop.permute.xlu0 %429
    %v432 = vmul.f32 %v430, %v300
    %v433 = vadd.f32 %v425, %v432
    %v434 = vmul.f32 %v423, %v418
    %v435 = vmul.f32 %v430, %v303
    %v436 = vadd.f32 %v434, %v435
    %v439 = vunpack.c.l.s4 1983009808
    %v440 = vunpack.c.0.s8 %v439
    %v441 = vlaneseq
    %v442 = vshrl.u32 %v441, 7
    %v443 = vsub.s32 %v440, %v442
    %v444 = vrot.slane %v434, %v443
    %445 = vrot.lane.b32.xlu0 %v444, 96
    %v446 = vpop.permute.xlu0 %445
    %vm448 = vcmask 779776
    %449 = vst.msk [vmem:[#allocation7] sm:$0x3] %vm448, %v446
    %v450 = vld [vmem:[#allocation2 + $0x6] sm:$0x3]
    %452 = vrot.lane.b32.xlu0 %v436, 32
    %v453 = vpop.permute.xlu0 %452
    %v454 = vsel %vm54, %v453, 0
    %456 = vmatprep.subr.mxu0 0.0
    %457 = vmatpush1.msra.mxu0 %v44
    %458 = vmatprep.subr.mxu0 0.0
    %459 = vmatpush1.msra.mxu0 %v45
    %460 = vmatprep.subr.mxu0 0.0
    %461 = vmatpush1.msra.mxu0 %v46
    %462 = vmatprep.subr.mxu0 0.0
    %463 = vmatpush1.msra.mxu0 %v47
    %464 = vmatprep.subr.mxu0 0.0
    %465 = vmatpush1.msra.mxu0 0.0
    %466 = vmatprep.subr.mxu0 0.0
    %467 = vmatpush1.msra.mxu0 0.0
    %468 = vmatprep.subr.mxu0 0.0
    %469 = vmatpush1.msra.mxu0 0.0
    %470 = vmatprep.subr.mxu0 0.0
    %471 = vmatpush1.msra.mxu0 0.0
    %472 = vmatprep.subr.mxu0 0.0
    %473 = vmatpush1.msra.mxu0 0.0
    %474 = vmatprep.subr.mxu0 0.0
    %475 = vmatpush1.msra.mxu0 0.0
    %476 = vmatprep.subr.mxu0 0.0
    %477 = vmatpush1.msra.mxu0 0.0
    %478 = vmatprep.subr.mxu0 0.0
    %479 = vmatpush1.msra.mxu0 0.0
    %480 = vmatprep.subr.mxu0 0.0
    %481 = vmatpush1.msra.mxu0 0.0
    %482 = vmatprep.subr.mxu0 0.0
    %483 = vmatpush1.msra.mxu0 0.0
    %484 = vmatprep.subr.mxu0 0.0
    %485 = vmatpush1.msra.mxu0 0.0
    %486 = vmatprep.subr.mxu0 0.0
    %487 = vmatpush1.msra.mxu0 0.0
    %488 = vmatprep.subr.mxu0 0.0
    %489 = vmatpush1.msra.mxu0 0.0
    %490 = vmatprep.subr.mxu0 0.0
    %491 = vmatpush1.msra.mxu0 0.0
    %492 = vmatprep.subr.mxu0 0.0
    %493 = vmatpush1.msra.mxu0 0.0
    %494 = vmatprep.subr.mxu0 0.0
    %495 = vmatpush1.msra.mxu0 0.0
    %496 = vmatprep.subr.mxu0 0.0
    %497 = vmatpush1.msra.mxu0 0.0
    %498 = vmatprep.subr.mxu0 0.0
    %499 = vmatpush1.msra.mxu0 0.0
    %500 = vmatprep.subr.mxu0 0.0
    %501 = vmatpush1.msra.mxu0 0.0
    %502 = vmatprep.subr.mxu0 0.0
    %503 = vmatpush1.msra.mxu0 0.0
    %504 = vmatprep.subr.mxu0 0.0
    %505 = vmatpush1.msra.mxu0 0.0
    %506 = vmatprep.subr.mxu0 0.0
    %507 = vmatpush1.msra.mxu0 0.0
    %508 = vmatprep.subr.mxu0 0.0
    %509 = vmatpush1.msra.mxu0 0.0
    %510 = vmatprep.subr.mxu0 0.0
    %511 = vmatpush1.msra.mxu0 0.0
    %512 = vmatprep.subr.mxu0 0.0
    %513 = vmatpush1.msra.mxu0 0.0
    %514 = vmatprep.subr.mxu0 0.0
    %515 = vmatpush1.msra.mxu0 0.0
    %516 = vmatprep.subr.mxu0 0.0
    %517 = vmatpush1.msra.mxu0 0.0
    %518 = vmatprep.subr.mxu0 0.0
    %519 = vmatpush1.msra.mxu0 0.0
    %520 = vmatprep.mubr.f32.mxu0 0.0
    %521 = vmatmul.mubr.f32.gmra.mrb[0].mxu0 %v454
    %v522 = vpop.f32.mrb[0].mxu0
    %v523 = vadd.f32 0.0, %v522
    %v524 = vpop.f32.mrb[0].mxu0
    %525 = vdwg.mxu0
    %v526 = vadd.f32 %v450, %v523
    %v527 = vtanh.pop %v526
    %v528 = vxor.u32 %v526, 2147483648
    %v529 = vmul.f32 %v528, 1.442695
    %v530 = vpow.pop %v529
    %v531 = vadd.f32 %v530, 1.0
    %v532 = vrcp.pop %v531
    %v533 = vmul.f32 1.0, %v532
    %v534 = vsel %vm52, %v527, %v533
    %v535 = vmul.f32 %v534, %v433
    %537 = vrot.lane.b32.xlu0 %v534, 64
    %v538 = vpop.permute.xlu0 %537
    %v540 = vmul.f32 %v534, %v538
    %542 = vrot.lane.b32.xlu0 %v540, 32
    %v543 = vpop.permute.xlu0 %542
    %v545 = vadd.f32 %v535, %v543
    %v546 = vtanh.pop %v545
    %548 = vrot.lane.b32.xlu0 %v546, 64
    %v549 = vpop.permute.xlu0 %548
    %v551 = vmul.f32 %v534, %v549
    %v552 = vld [vmem:[%s2] sm:$0x3]
    %554 = vset.pattern.permute.xlu0 3
    %555 = vperm.xlu0 %554, %v552
    %v556 = vpop.permute.xlu0 %555
    %v558 = vmul.f32 %v556, %v545
    %v559 = vsub.f32 1.0, %v552
    %561 = vset.pattern.permute.xlu0 3
    %562 = vperm.xlu0 %561, %v559
    %v563 = vpop.permute.xlu0 %562
    %v565 = vmul.f32 %v563, %v433
    %v566 = vadd.f32 %v558, %v565
    %v567 = vmul.f32 %v556, %v551
    %v568 = vmul.f32 %v563, %v436
    %v569 = vadd.f32 %v567, %v568
    %vm570 = vcmask 1042176
    %571 = vst.msk [vmem:[#allocation7] sm:$0x3] %vm570, %v567
    %v572 = vld [vmem:[#allocation2 + $0x8] sm:$0x3]
    %574 = vrot.lane.b32.xlu0 %v569, 32
    %v575 = vpop.permute.xlu0 %574
    %v576 = vsel %vm54, %v575, 0
    %578 = vmatprep.subr.mxu0 0.0
    %579 = vmatpush1.msra.mxu0 %v44
    %580 = vmatprep.subr.mxu0 0.0
    %581 = vmatpush1.msra.mxu0 %v45
    %582 = vmatprep.subr.mxu0 0.0
    %583 = vmatpush1.msra.mxu0 %v46
    %584 = vmatprep.subr.mxu0 0.0
    %585 = vmatpush1.msra.mxu0 %v47
    %586 = vmatprep.subr.mxu0 0.0
    %587 = vmatpush1.msra.mxu0 0.0
    %588 = vmatprep.subr.mxu0 0.0
    %589 = vmatpush1.msra.mxu0 0.0
    %590 = vmatprep.subr.mxu0 0.0
    %591 = vmatpush1.msra.mxu0 0.0
    %592 = vmatprep.subr.mxu0 0.0
    %593 = vmatpush1.msra.mxu0 0.0
    %594 = vmatprep.subr.mxu0 0.0
    %595 = vmatpush1.msra.mxu0 0.0
    %596 = vmatprep.subr.mxu0 0.0
    %597 = vmatpush1.msra.mxu0 0.0
    %598 = vmatprep.subr.mxu0 0.0
    %599 = vmatpush1.msra.mxu0 0.0
    %600 = vmatprep.subr.mxu0 0.0
    %601 = vmatpush1.msra.mxu0 0.0
    %602 = vmatprep.subr.mxu0 0.0
    %603 = vmatpush1.msra.mxu0 0.0
    %604 = vmatprep.subr.mxu0 0.0
    %605 = vmatpush1.msra.mxu0 0.0
    %606 = vmatprep.subr.mxu0 0.0
    %607 = vmatpush1.msra.mxu0 0.0
    %608 = vmatprep.subr.mxu0 0.0
    %609 = vmatpush1.msra.mxu0 0.0
    %610 = vmatprep.subr.mxu0 0.0
    %611 = vmatpush1.msra.mxu0 0.0
    %612 = vmatprep.subr.mxu0 0.0
    %613 = vmatpush1.msra.mxu0 0.0
    %614 = vmatprep.subr.mxu0 0.0
    %615 = vmatpush1.msra.mxu0 0.0
    %616 = vmatprep.subr.mxu0 0.0
    %617 = vmatpush1.msra.mxu0 0.0
    %618 = vmatprep.subr.mxu0 0.0
    %619 = vmatpush1.msra.mxu0 0.0
    %620 = vmatprep.subr.mxu0 0.0
    %621 = vmatpush1.msra.mxu0 0.0
    %622 = vmatprep.subr.mxu0 0.0
    %623 = vmatpush1.msra.mxu0 0.0
    %624 = vmatprep.subr.mxu0 0.0
    %625 = vmatpush1.msra.mxu0 0.0
    %626 = vmatprep.subr.mxu0 0.0
    %627 = vmatpush1.msra.mxu0 0.0
    %628 = vmatprep.subr.mxu0 0.0
    %629 = vmatpush1.msra.mxu0 0.0
    %630 = vmatprep.subr.mxu0 0.0
    %631 = vmatpush1.msra.mxu0 0.0
    %632 = vmatprep.subr.mxu0 0.0
    %633 = vmatpush1.msra.mxu0 0.0
    %634 = vmatprep.subr.mxu0 0.0
    %635 = vmatpush1.msra.mxu0 0.0
    %636 = vmatprep.subr.mxu0 0.0
    %637 = vmatpush1.msra.mxu0 0.0
    %638 = vmatprep.subr.mxu0 0.0
    %639 = vmatpush1.msra.mxu0 0.0
    %640 = vmatprep.subr.mxu0 0.0
    %641 = vmatpush1.msra.mxu0 0.0
    %642 = vmatprep.mubr.f32.mxu0 0.0
    %643 = vmatmul.mubr.f32.gmra.mrb[0].mxu0 %v576
    %v644 = vpop.f32.mrb[0].mxu0
    %v645 = vadd.f32 0.0, %v644
    %v646 = vpop.f32.mrb[0].mxu0
    %647 = vdwg.mxu0
    %v648 = vadd.f32 %v572, %v645
    %v649 = vtanh.pop %v648
    %v650 = vxor.u32 %v648, 2147483648
    %v651 = vmul.f32 %v650, 1.442695
    %v652 = vpow.pop %v651
    %v653 = vadd.f32 %v652, 1.0
    %v654 = vrcp.pop %v653
    %v655 = vmul.f32 1.0, %v654
    %v656 = vsel %vm52, %v649, %v655
    %v657 = vmul.f32 %v656, %v566
    %659 = vrot.lane.b32.xlu0 %v656, 64
    %v660 = vpop.permute.xlu0 %659
    %v662 = vmul.f32 %v656, %v660
    %664 = vrot.lane.b32.xlu0 %v662, 32
    %v665 = vpop.permute.xlu0 %664
    %v667 = vadd.f32 %v657, %v665
    %v668 = vtanh.pop %v667
    %670 = vrot.lane.b32.xlu0 %v668, 64
    %v671 = vpop.permute.xlu0 %670
    %v673 = vmul.f32 %v656, %v671
    %v674 = vld [vmem:[%s2] sm:$0x3]
    %676 = vset.pattern.permute.xlu0 4
    %677 = vperm.xlu0 %676, %v674
    %v678 = vpop.permute.xlu0 %677
    %v680 = vmul.f32 %v678, %v667
    %v681 = vsub.f32 1.0, %v674
    %683 = vset.pattern.permute.xlu0 4
    %684 = vperm.xlu0 %683, %v681
    %v685 = vpop.permute.xlu0 %684
    %v687 = vmul.f32 %v685, %v566
    %v688 = vadd.f32 %v680, %v687
    %v689 = vmul.f32 %v678, %v673
    %v690 = vmul.f32 %v685, %v569
    %v691 = vadd.f32 %v689, %v690
    %v694 = vunpack.c.l.s4 1983009808
    %v695 = vunpack.c.0.s8 %v694
    %v696 = vlaneseq
    %v697 = vshrl.u32 %v696, 7
    %v698 = vsub.s32 %v695, %v697
    %v699 = vrot.slane %v689, %v698
    %700 = vrot.lane.b32.xlu0 %v699, 32
    %v701 = vpop.permute.xlu0 %700
    %703 = vst.msk [vmem:[#allocation7 + $0x2] sm:$0x3] %vm182, %v701
    %v704 = vld [vmem:[#allocation2 + $0xa] sm:$0x3]
    %706 = vrot.lane.b32.xlu0 %v691, 32
    %v707 = vpop.permute.xlu0 %706
    %v708 = vsel %vm54, %v707, 0
    %710 = vmatprep.subr.mxu0 0.0
    %711 = vmatpush1.msra.mxu0 %v44
    %712 = vmatprep.subr.mxu0 0.0
    %713 = vmatpush1.msra.mxu0 %v45
    %714 = vmatprep.subr.mxu0 0.0
    %715 = vmatpush1.msra.mxu0 %v46
    %716 = vmatprep.subr.mxu0 0.0
    %717 = vmatpush1.msra.mxu0 %v47
    %718 = vmatprep.subr.mxu0 0.0
    %719 = vmatpush1.msra.mxu0 0.0
    %720 = vmatprep.subr.mxu0 0.0
    %721 = vmatpush1.msra.mxu0 0.0
    %722 = vmatprep.subr.mxu0 0.0
    %723 = vmatpush1.msra.mxu0 0.0
    %724 = vmatprep.subr.mxu0 0.0
    %725 = vmatpush1.msra.mxu0 0.0
    %726 = vmatprep.subr.mxu0 0.0
    %727 = vmatpush1.msra.mxu0 0.0
    %728 = vmatprep.subr.mxu0 0.0
    %729 = vmatpush1.msra.mxu0 0.0
    %730 = vmatprep.subr.mxu0 0.0
    %731 = vmatpush1.msra.mxu0 0.0
    %732 = vmatprep.subr.mxu0 0.0
    %733 = vmatpush1.msra.mxu0 0.0
    %734 = vmatprep.subr.mxu0 0.0
    %735 = vmatpush1.msra.mxu0 0.0
    %736 = vmatprep.subr.mxu0 0.0
    %737 = vmatpush1.msra.mxu0 0.0
    %738 = vmatprep.subr.mxu0 0.0
    %739 = vmatpush1.msra.mxu0 0.0
    %740 = vmatprep.subr.mxu0 0.0
    %741 = vmatpush1.msra.mxu0 0.0
    %742 = vmatprep.subr.mxu0 0.0
    %743 = vmatpush1.msra.mxu0 0.0
    %744 = vmatprep.subr.mxu0 0.0
    %745 = vmatpush1.msra.mxu0 0.0
    %746 = vmatprep.subr.mxu0 0.0
    %747 = vmatpush1.msra.mxu0 0.0
    %748 = vmatprep.subr.mxu0 0.0
    %749 = vmatpush1.msra.mxu0 0.0
    %750 = vmatprep.subr.mxu0 0.0
    %751 = vmatpush1.msra.mxu0 0.0
    %752 = vmatprep.subr.mxu0 0.0
    %753 = vmatpush1.msra.mxu0 0.0
    %754 = vmatprep.subr.mxu0 0.0
    %755 = vmatpush1.msra.mxu0 0.0
    %756 = vmatprep.subr.mxu0 0.0
    %757 = vmatpush1.msra.mxu0 0.0
    %758 = vmatprep.subr.mxu0 0.0
    %759 = vmatpush1.msra.mxu0 0.0
    %760 = vmatprep.subr.mxu0 0.0
    %761 = vmatpush1.msra.mxu0 0.0
    %762 = vmatprep.subr.mxu0 0.0
    %763 = vmatpush1.msra.mxu0 0.0
    %764 = vmatprep.subr.mxu0 0.0
    %765 = vmatpush1.msra.mxu0 0.0
    %766 = vmatprep.subr.mxu0 0.0
    %767 = vmatpush1.msra.mxu0 0.0
    %768 = vmatprep.subr.mxu0 0.0
    %769 = vmatpush1.msra.mxu0 0.0
    %770 = vmatprep.subr.mxu0 0.0
    %771 = vmatpush1.msra.mxu0 0.0
    %772 = vmatprep.subr.mxu0 0.0
    %773 = vmatpush1.msra.mxu0 0.0
    %774 = vmatprep.mubr.f32.mxu0 0.0
    %775 = vmatmul.mubr.f32.gmra.mrb[0].mxu0 %v708
    %v776 = vpop.f32.mrb[0].mxu0
    %v777 = vadd.f32 0.0, %v776
    %v778 = vpop.f32.mrb[0].mxu0
    %779 = vdwg.mxu0
    %v780 = vadd.f32 %v704, %v777
    %v781 = vtanh.pop %v780
    %v782 = vxor.u32 %v780, 2147483648
    %v783 = vmul.f32 %v782, 1.442695
    %v784 = vpow.pop %v783
    %v785 = vadd.f32 %v784, 1.0
    %v786 = vrcp.pop %v785
    %v787 = vmul.f32 1.0, %v786
    %v788 = vsel %vm52, %v781, %v787
    %v789 = vmul.f32 %v788, %v688
    %791 = vrot.lane.b32.xlu0 %v788, 64
    %v792 = vpop.permute.xlu0 %791
    %v794 = vmul.f32 %v788, %v792
    %796 = vrot.lane.b32.xlu0 %v794, 32
    %v797 = vpop.permute.xlu0 %796
    %v799 = vadd.f32 %v789, %v797
    %v800 = vtanh.pop %v799
    %802 = vrot.lane.b32.xlu0 %v800, 64
    %v803 = vpop.permute.xlu0 %802
    %v805 = vmul.f32 %v788, %v803
    %v806 = vld [vmem:[%s2] sm:$0x3]
    %808 = vset.pattern.permute.xlu0 5
    %809 = vperm.xlu0 %808, %v806
    %v810 = vpop.permute.xlu0 %809
    %v812 = vmul.f32 %v810, %v799
    %v813 = vsub.f32 1.0, %v806
    %815 = vset.pattern.permute.xlu0 5
    %816 = vperm.xlu0 %815, %v813
    %v817 = vpop.permute.xlu0 %816
    %v819 = vmul.f32 %v817, %v688
    %v820 = vadd.f32 %v812, %v819
    %v821 = vmul.f32 %v810, %v805
    %v822 = vmul.f32 %v817, %v691
    %v823 = vadd.f32 %v821, %v822
    %v826 = vunpack.c.l.s4 1983009808
    %v827 = vunpack.c.0.s8 %v826
    %v828 = vlaneseq
    %v829 = vshrl.u32 %v828, 7
    %v830 = vsub.s32 %v827, %v829
    %v831 = vrot.slane %v821, %v830
    %832 = vrot.lane.b32.xlu0 %v831, 64
    %v833 = vpop.permute.xlu0 %832
    %835 = vst.msk [vmem:[#allocation7 + $0x2] sm:$0x3] %vm315, %v833
    %v836 = vld [vmem:[#allocation2 + $0xc] sm:$0x3]
    %838 = vrot.lane.b32.xlu0 %v823, 32
    %v839 = vpop.permute.xlu0 %838
    %v840 = vsel %vm54, %v839, 0
    %842 = vmatprep.subr.mxu0 0.0
    %843 = vmatpush1.msra.mxu0 %v44
    %844 = vmatprep.subr.mxu0 0.0
    %845 = vmatpush1.msra.mxu0 %v45
    %846 = vmatprep.subr.mxu0 0.0
    %847 = vmatpush1.msra.mxu0 %v46
    %848 = vmatprep.subr.mxu0 0.0
    %849 = vmatpush1.msra.mxu0 %v47
    %850 = vmatprep.subr.mxu0 0.0
    %851 = vmatpush1.msra.mxu0 0.0
    %852 = vmatprep.subr.mxu0 0.0
    %853 = vmatpush1.msra.mxu0 0.0
    %854 = vmatprep.subr.mxu0 0.0
    %855 = vmatpush1.msra.mxu0 0.0
    %856 = vmatprep.subr.mxu0 0.0
    %857 = vmatpush1.msra.mxu0 0.0
    %858 = vmatprep.subr.mxu0 0.0
    %859 = vmatpush1.msra.mxu0 0.0
    %860 = vmatprep.subr.mxu0 0.0
    %861 = vmatpush1.msra.mxu0 0.0
    %862 = vmatprep.subr.mxu0 0.0
    %863 = vmatpush1.msra.mxu0 0.0
    %864 = vmatprep.subr.mxu0 0.0
    %865 = vmatpush1.msra.mxu0 0.0
    %866 = vmatprep.subr.mxu0 0.0
    %867 = vmatpush1.msra.mxu0 0.0
    %868 = vmatprep.subr.mxu0 0.0
    %869 = vmatpush1.msra.mxu0 0.0
    %870 = vmatprep.subr.mxu0 0.0
    %871 = vmatpush1.msra.mxu0 0.0
    %872 = vmatprep.subr.mxu0 0.0
    %873 = vmatpush1.msra.mxu0 0.0
    %874 = vmatprep.subr.mxu0 0.0
    %875 = vmatpush1.msra.mxu0 0.0
    %876 = vmatprep.subr.mxu0 0.0
    %877 = vmatpush1.msra.mxu0 0.0
    %878 = vmatprep.subr.mxu0 0.0
    %879 = vmatpush1.msra.mxu0 0.0
    %880 = vmatprep.subr.mxu0 0.0
    %881 = vmatpush1.msra.mxu0 0.0
    %882 = vmatprep.subr.mxu0 0.0
    %883 = vmatpush1.msra.mxu0 0.0
    %884 = vmatprep.subr.mxu0 0.0
    %885 = vmatpush1.msra.mxu0 0.0
    %886 = vmatprep.subr.mxu0 0.0
    %887 = vmatpush1.msra.mxu0 0.0
    %888 = vmatprep.subr.mxu0 0.0
    %889 = vmatpush1.msra.mxu0 0.0
    %890 = vmatprep.subr.mxu0 0.0
    %891 = vmatpush1.msra.mxu0 0.0
    %892 = vmatprep.subr.mxu0 0.0
    %893 = vmatpush1.msra.mxu0 0.0
    %894 = vmatprep.subr.mxu0 0.0
    %895 = vmatpush1.msra.mxu0 0.0
    %896 = vmatprep.subr.mxu0 0.0
    %897 = vmatpush1.msra.mxu0 0.0
    %898 = vmatprep.subr.mxu0 0.0
    %899 = vmatpush1.msra.mxu0 0.0
    %900 = vmatprep.subr.mxu0 0.0
    %901 = vmatpush1.msra.mxu0 0.0
    %902 = vmatprep.subr.mxu0 0.0
    %903 = vmatpush1.msra.mxu0 0.0
    %904 = vmatprep.subr.mxu0 0.0
    %905 = vmatpush1.msra.mxu0 0.0
    %906 = vmatprep.mubr.f32.mxu0 0.0
    %907 = vmatmul.mubr.f32.gmra.mrb[0].mxu0 %v840
    %v908 = vpop.f32.mrb[0].mxu0
    %v909 = vadd.f32 0.0, %v908
    %v910 = vpop.f32.mrb[0].mxu0
    %911 = vdwg.mxu0
    %v912 = vadd.f32 %v836, %v909
    %v913 = vtanh.pop %v912
    %v914 = vxor.u32 %v912, 2147483648
    %v915 = vmul.f32 %v914, 1.442695
    %v916 = vpow.pop %v915
    %v917 = vadd.f32 %v916, 1.0
    %v918 = vrcp.pop %v917
    %v919 = vmul.f32 1.0, %v918
    %v920 = vsel %vm52, %v913, %v919
    %v921 = vmul.f32 %v920, %v820
    %923 = vrot.lane.b32.xlu0 %v920, 64
    %v924 = vpop.permute.xlu0 %923
    %v926 = vmul.f32 %v920, %v924
    %928 = vrot.lane.b32.xlu0 %v926, 32
    %v929 = vpop.permute.xlu0 %928
    %v931 = vadd.f32 %v921, %v929
    %v932 = vtanh.pop %v931
    %934 = vrot.lane.b32.xlu0 %v932, 64
    %v935 = vpop.permute.xlu0 %934
    %v937 = vmul.f32 %v920, %v935
    %v938 = vld [vmem:[%s2] sm:$0x3]
    %940 = vset.pattern.permute.xlu0 6
    %941 = vperm.xlu0 %940, %v938
    %v942 = vpop.permute.xlu0 %941
    %v944 = vmul.f32 %v942, %v931
    %v945 = vsub.f32 1.0, %v938
    %947 = vset.pattern.permute.xlu0 6
    %948 = vperm.xlu0 %947, %v945
    %v949 = vpop.permute.xlu0 %948
    %v951 = vmul.f32 %v949, %v820
    %v952 = vadd.f32 %v944, %v951
    %v953 = vmul.f32 %v942, %v937
    %v954 = vmul.f32 %v949, %v823
    %v955 = vadd.f32 %v953, %v954
    %v958 = vunpack.c.l.s4 1983009808
    %v959 = vunpack.c.0.s8 %v958
    %v960 = vlaneseq
    %v961 = vshrl.u32 %v960, 7
    %v962 = vsub.s32 %v959, %v961
    %v963 = vrot.slane %v953, %v962
    %964 = vrot.lane.b32.xlu0 %v963, 96
    %v965 = vpop.permute.xlu0 %964
    %967 = vst.msk [vmem:[#allocation7 + $0x2] sm:$0x3] %vm448, %v965
    %v968 = vld [vmem:[#allocation2 + $0xe] sm:$0x3]
    %970 = vrot.lane.b32.xlu0 %v955, 32
    %v971 = vpop.permute.xlu0 %970
    %v972 = vsel %vm54, %v971, 0
    %974 = vmatprep.subr.mxu0 0.0
    %975 = vmatpush1.msra.mxu0 %v44
    %976 = vmatprep.subr.mxu0 0.0
    %977 = vmatpush1.msra.mxu0 %v45
    %978 = vmatprep.subr.mxu0 0.0
    %979 = vmatpush1.msra.mxu0 %v46
    %980 = vmatprep.subr.mxu0 0.0
    %981 = vmatpush1.msra.mxu0 %v47
    %982 = vmatprep.subr.mxu0 0.0
    %983 = vmatpush1.msra.mxu0 0.0
    %984 = vmatprep.subr.mxu0 0.0
    %985 = vmatpush1.msra.mxu0 0.0
    %986 = vmatprep.subr.mxu0 0.0
    %987 = vmatpush1.msra.mxu0 0.0
    %988 = vmatprep.subr.mxu0 0.0
    %989 = vmatpush1.msra.mxu0 0.0
    %990 = vmatprep.subr.mxu0 0.0
    %991 = vmatpush1.msra.mxu0 0.0
    %992 = vmatprep.subr.mxu0 0.0
    %993 = vmatpush1.msra.mxu0 0.0
    %994 = vmatprep.subr.mxu0 0.0
    %995 = vmatpush1.msra.mxu0 0.0
    %996 = vmatprep.subr.mxu0 0.0
    %997 = vmatpush1.msra.mxu0 0.0
    %998 = vmatprep.subr.mxu0 0.0
    %999 = vmatpush1.msra.mxu0 0.0
    %1000 = vmatprep.subr.mxu0 0.0
    %1001 = vmatpush1.msra.mxu0 0.0
    %1002 = vmatprep.subr.mxu0 0.0
    %1003 = vmatpush1.msra.mxu0 0.0
    %1004 = vmatprep.subr.mxu0 0.0
    %1005 = vmatpush1.msra.mxu0 0.0
    %1006 = vmatprep.subr.mxu0 0.0
    %1007 = vmatpush1.msra.mxu0 0.0
    %1008 = vmatprep.subr.mxu0 0.0
    %1009 = vmatpush1.msra.mxu0 0.0
    %1010 = vmatprep.subr.mxu0 0.0
    %1011 = vmatpush1.msra.mxu0 0.0
    %1012 = vmatprep.subr.mxu0 0.0
    %1013 = vmatpush1.msra.mxu0 0.0
    %1014 = vmatprep.subr.mxu0 0.0
    %1015 = vmatpush1.msra.mxu0 0.0
    %1016 = vmatprep.subr.mxu0 0.0
    %1017 = vmatpush1.msra.mxu0 0.0
    %1018 = vmatprep.subr.mxu0 0.0
    %1019 = vmatpush1.msra.mxu0 0.0
    %1020 = vmatprep.subr.mxu0 0.0
    %1021 = vmatpush1.msra.mxu0 0.0
    %1022 = vmatprep.subr.mxu0 0.0
    %1023 = vmatpush1.msra.mxu0 0.0
    %1024 = vmatprep.subr.mxu0 0.0
    %1025 = vmatpush1.msra.mxu0 0.0
    %1026 = vmatprep.subr.mxu0 0.0
    %1027 = vmatpush1.msra.mxu0 0.0
    %1028 = vmatprep.subr.mxu0 0.0
    %1029 = vmatpush1.msra.mxu0 0.0
    %1030 = vmatprep.subr.mxu0 0.0
    %1031 = vmatpush1.msra.mxu0 0.0
    %1032 = vmatprep.subr.mxu0 0.0
    %1033 = vmatpush1.msra.mxu0 0.0
    %1034 = vmatprep.subr.mxu0 0.0
    %1035 = vmatpush1.msra.mxu0 0.0
    %1036 = vmatprep.subr.mxu0 0.0
    %1037 = vmatpush1.msra.mxu0 0.0
    %1038 = vmatprep.mubr.f32.mxu0 0.0
    %1039 = vmatmul.mubr.f32.gmra.mrb[0].mxu0 %v972
    %v1040 = vpop.f32.mrb[0].mxu0
    %v1041 = vadd.f32 0.0, %v1040
    %v1042 = vpop.f32.mrb[0].mxu0
    %1043 = vdwg.mxu0
    %v1044 = vadd.f32 %v968, %v1041
    %v1045 = vtanh.pop %v1044
    %v1046 = vxor.u32 %v1044, 2147483648
    %v1047 = vmul.f32 %v1046, 1.442695
    %v1048 = vpow.pop %v1047
    %v1049 = vadd.f32 %v1048, 1.0
    %v1050 = vrcp.pop %v1049
    %v1051 = vmul.f32 1.0, %v1050
    %v1052 = vsel %vm52, %v1045, %v1051
    %v1053 = vmul.f32 %v1052, %v952
    %1055 = vrot.lane.b32.xlu0 %v1052, 64
    %v1056 = vpop.permute.xlu0 %1055
    %v1058 = vmul.f32 %v1052, %v1056
    %1060 = vrot.lane.b32.xlu0 %v1058, 32
    %v1061 = vpop.permute.xlu0 %1060
    %v1063 = vadd.f32 %v1053, %v1061
    %v1064 = vtanh.pop %v1063
    %1066 = vrot.lane.b32.xlu0 %v1064, 64
    %v1067 = vpop.permute.xlu0 %1066
    %v1069 = vmul.f32 %v1052, %v1067
    %v1070 = vld [vmem:[%s2] sm:$0x3]
    %1072 = vset.pattern.permute.xlu0 7
    %1073 = vperm.xlu0 %1072, %v1070
    %v1074 = vpop.permute.xlu0 %1073
    %v1076 = vmul.f32 %v1074, %v1069
    %v1077 = vsub.f32 1.0, %v1070
    %1079 = vset.pattern.permute.xlu0 7
    %1080 = vperm.xlu0 %1079, %v1077
    %v1081 = vpop.permute.xlu0 %1080
    %v1083 = vmul.f32 %v1081, %v955
    %v1084 = vadd.f32 %v1076, %v1083
    %1085 = vst.msk [vmem:[#allocation7 + $0x2] sm:$0x3] %vm570, %v1076
    %1087 = vrot.lane.b32.xlu0 %v1084, 32
    %v1088 = vpop.permute.xlu0 %1087
    %1090 = vst.msk [vmem:[#allocation8] sm:$0x3] %vm182, %v1088
    // Predicated region
    $region22: #{tpu_custom_call.1} parent=1 // pred_check
      _
    $region23: #{tpu_custom_call.1} parent=1 // pred_check_branch
      %1092 = sbr.rel (0) target = $region25
    $region24: #{tpu_custom_call.1} parent=1 // pred_region
      %s1094 = ssub.s32 64, 64
      %1095 = vsyncadd [#allocation4], %s1094
      %s1097 = sshll.u32 [#allocation7], 4
      %s1098 = int_to_ptr.vmem [resolvable:$true] %s1097
      %1100 = dma.vmem_to_hbm [thread:$0]  %s1098, 64, %s3, [#allocation4]
    $region25: #{tpu_custom_call.1} parent=1 // pred_fallthru
      _
    // Predicated region
    $region26: #{tpu_custom_call.1} parent=1 // pred_check
      _
    $region27: #{tpu_custom_call.1} parent=1 // pred_check_branch
      %1102 = sbr.rel (0) target = $region29
    $region28: #{tpu_custom_call.1} parent=1 // pred_region
      %s1104 = ssub.s32 32, 32
      %1105 = vsyncadd [#allocation9], %s1104
      %s1107 = sshll.u32 [#allocation8], 4
      %s1108 = int_to_ptr.vmem [resolvable:$true] %s1107
      %1110 = dma.vmem_to_hbm [thread:$0]  %s1108, 32, %s4, [#allocation9]
    $region29: #{tpu_custom_call.1} parent=1 // pred_fallthru
      _
    // Predicated region
    $region30: #{tpu_custom_call.1} parent=1 // pred_check
      _
    $region31: #{tpu_custom_call.1} parent=1 // pred_check_branch
      %1112 = sbr.rel (0) target = $region33
    $region32: #{tpu_custom_call.1} parent=1 // pred_region
      %1113 = dma.done [#allocation4], 64
    $region33: #{tpu_custom_call.1} parent=1 // pred_fallthru
      _
    // Predicated region
    $region34: #{tpu_custom_call.1} parent=1 // pred_check
      _
    $region35: #{tpu_custom_call.1} parent=1 // pred_check_branch
      %1115 = sbr.rel (0) target = $region37
    $region36: #{tpu_custom_call.1} parent=1 // pred_region
      %1116 = dma.done [#allocation9], 32
    $region37: #{tpu_custom_call.1} parent=1 // pred_fallthru
      _
    %1117 = vsyncpa [#allocation3], 1
    %1118 = vsyncpa [#allocation6], 1
    %1119 = vsyncpa [#allocation4], 1
    %1120 = vsyncpa [#allocation9], 1

</llo_original>
